<compile_context>
chip_gen: v5e
topology: v5e:2x2
jax: 0.10.0
libtpu: 0.0.40
codegen_flags: <defaults>
</compile_context>

<pallas_src>
import functools

import jax
import jax.numpy as jnp
from jax import lax
from jax.experimental import pallas as pl
from jax.experimental.pallas import tpu as pltpu


def _round_up(x, m):
    return (x + m - 1) // m * m


def _vmem_capacity_bytes():
    """Best-effort VMEM capacity query; conservative (v7x-safe) fallback."""
    try:
        return int(pltpu.get_tpu_info().vmem_capacity_bytes)
    except Exception:
        pass
    try:
        kind = jax.devices()[0].device_kind.lower()
        if "v5" in kind or "v6" in kind:
            return 128 << 20
    except Exception:
        pass
    return 64 << 20  # conservative: assume v7x-sized VMEM


def _make_kernel(s_actual, tk, need_mask, mm_dtype, approx_recip):
    """Flash-attention kernel body.

    Static closure args: true seq len, K tile, whether padded keys exist,
    optional reduced-precision matmul dtype, and reciprocal mode.
    """

    def kernel(q_ref, kv_ref, o_ref, m_sc, l_sc, acc_sc):
        ki = pl.program_id(2)
        last_k = pl.num_programs(2) - 1

        @pl.when(ki == 0)
        def _init():
            m_sc[...] = jnp.full_like(m_sc, -jnp.inf)
            l_sc[...] = jnp.zeros_like(l_sc)
            acc_sc[...] = jnp.zeros_like(acc_sc)

        q = q_ref[...]    # (Bb, TQ, Dp)
        kv = kv_ref[...]  # (Bb, TK, Dp)

        if mm_dtype is not None and q.dtype != mm_dtype:
            # Reduced-precision MXU operands (f32 accumulation kept below).
            q_mm = q.astype(mm_dtype)
            kv_mm = kv.astype(mm_dtype)
        else:
            q_mm, kv_mm = q, kv

        # scores = q @ kv^T, contracting D of both operands (no materialized
        # transpose); accumulate in f32 on the MXU.
        s = lax.dot_general(
            q_mm, kv_mm,
            dimension_numbers=(((2,), (2,)), ((0,), (0,))),
            preferred_element_type=jnp.float32,
        )  # (Bb, TQ, TK)

        if need_mask:
            # Only the last k tile can contain zero-padded key positions.
            # Build a tiny (1, 1, TK) mask and fold the scalar "not last tile"
            # condition into it, so interior steps pay only the broadcast
            # select rather than a full-tile iota+add+cmp+select.
            kpos = lax.broadcasted_iota(jnp.int32, (1, 1, tk), 2) + ki * tk
            keep = (kpos < s_actual) | (ki != last_k)
            s = jnp.where(keep, s, jnp.float32(-1e30))

        # Online (flash) softmax update.
        m_prev = m_sc[...]                                        # (Bb, TQ, 1)
        m_new = jnp.maximum(m_prev, jnp.max(s, axis=-1, keepdims=True))
        alpha = jnp.exp(m_prev - m_new)
        p = jnp.exp(s - m_new)                                    # unnormalized
        l_sc[...] = alpha * l_sc[...] + jnp.sum(p, axis=-1, keepdims=True)

        # Deferred normalization: PV matmul on unnormalized probabilities.
        pv_dtype = mm_dtype if mm_dtype is not None else kv.dtype
        pv = lax.dot_general(
            p.astype(pv_dtype), kv_mm,
            dimension_numbers=(((2,), (1,)), ((0,), (0,))),
            preferred_element_type=jnp.float32,
        )  # (Bb, TQ, Dp)
        acc_sc[...] = alpha * acc_sc[...] + pv
        m_sc[...] = m_new

        @pl.when(ki == last_k)
        def _finalize():
            # Normalize once over (TQ, D) instead of (TQ, TK) every step.
            # approx=True (EUP slot) is enabled with the reduced-precision
            # matmul path; exact divide otherwise to preserve f32 numerics
            # (it runs only once per q tile, so the cost is negligible).
            inv = pl.reciprocal(l_sc[...], approx=approx_recip)
            o_ref[...] = (acc_sc[...] * inv).astype(o_ref.dtype)

    return kernel


@functools.partial(jax.jit, static_argnames=("use_bf16_matmul",))
def dot_product_attention(inp, use_bf16_matmul=False):
    """inp: (B, S, D). Returns softmax(inp @ inp^T, axis=-1) @ inp, shape (B, S, D).

    No 1/sqrt(D) scaling, matching the PyTorch module (scale defined but unused).
    """
    B, S, D = inp.shape
    itemsize = jnp.dtype(inp.dtype).itemsize

    # ---- per-generation VMEM budget & tile table ---------------------------
    vmem_cap = _vmem_capacity_bytes()
    big_vmem = vmem_cap >= (96 << 20)            # v5e / v6e: 128 MiB; v7x: 64 MiB
    vmem_limit_cap = (100 << 20) if big_vmem else (48 << 20)
    if big_vmem:
        tq_max, tk_max = 1024, 2048              # v5e / v6e
    else:
        tq_max, tk_max = 512, 2048               # v7x (64 MiB VMEM)

    d_pad = _round_up(D, 128)                    # lane-dense loads/stores

    if S <= tq_max:
        # Single Q/K tile; pad to a multiple of 128 so exp / reductions /
        # stores stay full-vreg (lane-dense), relying on the key mask.
        s_pad = _round_up(S, 128)
        tq = tk = s_pad
    else:
        tq = tq_max
        s_pad = _round_up(S, tq)
        # Largest K tile (multiple of tq) that divides the padded length.
        tk = tq
        for mult in (8, 4, 2):
            cand = tq * mult
            if cand <= tk_max and s_pad % cand == 0:
                tk = cand
                break

    # ---- batch folding for tiny problems (amortize ~0.35 us/grid-step) -----
    bb = 1
    if s_pad == tq:  # single-tile path
        fold_budget = (16 << 20) if big_vmem else (6 << 20)
        per_b = (
            3 * s_pad * d_pad * itemsize     # q / kv / out blocks (per buffer)
            + 2 * s_pad * s_pad * 4          # f32 score + prob temporaries
            + s_pad * d_pad * 4              # f32 accumulator scratch
        )
        bb = max(1, min(B, fold_budget // per_b))
        if not big_vmem:
            # v7x has 2 TensorCores: keep >= 2 parallel grid steps so the
            # second core isn't idled by over-aggressive folding.
            bb = min(bb, max(1, B // 2))
        while B % bb:
            bb -= 1

    need_mask = s_pad != S

    # ---- pad to tile-aligned shape (zeros don't perturb scores; padded key
    # positions are masked on the last k tile; padded query rows / feature
    # columns are sliced off) -------------------------------------------------
    if s_pad != S or d_pad != D:
        inp_p = jnp.pad(inp, ((0, 0), (0, s_pad - S), (0, d_pad - D)))
    else:
        inp_p = inp

    grid = (B // bb, s_pad // tq, s_pad // tk)

    # ---- explicit VMEM budget (double-buffered blocks + temporaries) -------
    score_tmp_bytes = 2 * bb * tq * tk * 4            # f32 s and p (both live)
    cast_tmp_bytes = 0
    if use_bf16_matmul:
        cast_tmp_bytes = bb * (tq * tk + tq * d_pad + tk * d_pad) * 2
    vmem_bytes = (
        2 * bb * tq * d_pad * itemsize                # q blocks (double-buffered)
        + 2 * bb * tk * d_pad * itemsize              # kv blocks (double-buffered)
        + 2 * bb * tq * d_pad * itemsize              # out blocks (double-buffered)
        + score_tmp_bytes
        + cast_tmp_bytes
        + bb * tq * d_pad * 4                         # f32 accumulator scratch
        + 2 * bb * tq * 4                             # running max / denominator
    )
    vmem_limit = int(min(max(2 * vmem_bytes, 8 << 20), vmem_limit_cap))

    mm_dtype = jnp.bfloat16 if use_bf16_matmul else None
    kernel = _make_kernel(S, tk, need_mask, mm_dtype, approx_recip=use_bf16_matmul)

    out_p = pl.pallas_call(
        kernel,
        out_shape=jax.ShapeDtypeStruct((B, s_pad, d_pad), inp.dtype),
        grid_spec=pltpu.PrefetchScalarGridSpec(
            num_scalar_prefetch=0,
            grid=grid,
            in_specs=[
                # Q tile: indexed by (batch tile, q tile)
                pl.BlockSpec((bb, tq, d_pad), lambda b, qi, ki: (b, qi, 0)),
                # K/V tile (same tensor): indexed by (batch tile, k tile)
                pl.BlockSpec((bb, tk, d_pad), lambda b, qi, ki: (b, ki, 0)),
            ],
            out_specs=pl.BlockSpec((bb, tq, d_pad), lambda b, qi, ki: (b, qi, 0)),
            scratch_shapes=[
                pltpu.VMEM((bb, tq, 1), jnp.float32),      # running max
                pltpu.VMEM((bb, tq, 1), jnp.float32),      # running denominator
                pltpu.VMEM((bb, tq, d_pad), jnp.float32),  # output accumulator
            ],
        ),
        compiler_params=pltpu.CompilerParams(
            dimension_semantics=("parallel", "parallel", "arbitrary"),
            vmem_limit_bytes=vmem_limit,
        ),
    )(inp_p, inp_p)

    return out_p[:, :S, :D]


def _reference(inp):
    # Pure-JAX reference mirroring the PyTorch forward (no scaling).
    raw = jnp.einsum("bsd,btd->bst", inp, inp)
    w = jax.nn.softmax(raw, axis=2)
    return jnp.einsum("bst,btd->bsd", w, inp)


if __name__ == "__main__":
    # DotProductAttention(embedding_dim=32) applied to (B=2, S=8, D=32).
    key = jax.random.PRNGKey(0)
    B, S, D = 2, 8, 32
    inp = jax.random.normal(key, (B, S, D), dtype=jnp.float32)

    out = jax.block_until_ready(dot_product_attention(inp))
    ref = _reference(inp)
    assert out.shape == (B, S, D)
    assert jnp.allclose(out, ref, atol=1e-5, rtol=1e-5), "small-shape mismatch"

    # Tiled flash path: multiple q/k tiles + last-tile key-padding mask.
    inp2 = jax.random.normal(jax.random.PRNGKey(1), (2, 2100, 32), dtype=jnp.float32)
    out2 = jax.block_until_ready(dot_product_attention(inp2))
    ref2 = _reference(inp2)
    assert out2.shape == inp2.shape
    assert jnp.allclose(out2, ref2, atol=2e-4, rtol=2e-4), "tiled-path mismatch"

    # Reduced-precision MXU path (bf16 operands + approx reciprocal) — the
    # big compute lever when the accuracy budget allows; loose tolerance.
    inp3 = jax.random.normal(jax.random.PRNGKey(2), (2, 256, 32), dtype=jnp.float32)
    out3 = jax.block_until_ready(dot_product_attention(inp3, use_bf16_matmul=True))
    ref3 = _reference(inp3)
    assert out3.shape == inp3.shape
    assert jnp.allclose(out3, ref3, atol=1e-1, rtol=1e-1), "bf16-path mismatch"

    print("KERNEL_OK")
</pallas_src>

<mosaic_0001>
module attributes {stable_mosaic.version = 11 : i64} {
  func.func @kernel(%arg0: i32, %arg1: i32, %arg2: i32, %arg3: memref<1x128x128xf32, #tpu.memory_space<vmem>>, %arg4: memref<1x128x128xf32, #tpu.memory_space<vmem>>, %arg5: memref<1x128x128xf32, #tpu.memory_space<vmem>>, %arg6: memref<1x128x1xf32, #tpu.memory_space<vmem>>, %arg7: memref<1x128x1xf32, #tpu.memory_space<vmem>>, %arg8: memref<1x128x128xf32, #tpu.memory_space<vmem>>) attributes {dimension_semantics = [#tpu.dimension_semantics<parallel>, #tpu.dimension_semantics<parallel>, #tpu.dimension_semantics<arbitrary>], iteration_bounds = array<i64: 2, 1, 1>, scalar_prefetch = 0 : i64, scratch_operands = 3 : i64, tpu.core_type = #tpu.core_type<tc>, window_params = [{transform_indices = @transform_0, window_bounds = array<i64: 1, 128, 128>}, {transform_indices = @transform_1, window_bounds = array<i64: 1, 128, 128>}, {transform_indices = @transform_2, window_bounds = array<i64: 1, 128, 128>}]} {
    %c0_i32 = arith.constant 0 : i32
    %0 = arith.cmpi eq, %arg2, %c0_i32 : i32
    %1 = arith.extui %0 : i1 to i32
    %c0_i32_0 = arith.constant 0 : i32
    %2 = arith.cmpi ne, %1, %c0_i32_0 : i32
    scf.if %2 {
      %cst_31 = arith.constant 0xFF800000 : f32
      %44 = vector.broadcast %cst_31 : f32 to vector<1x128x1xf32>
      %c0_32 = arith.constant 0 : index
      %c0_33 = arith.constant 0 : index
      %c0_34 = arith.constant 0 : index
      %45 = vector.load %arg6[%c0_32, %c0_33, %c0_34] : memref<1x128x1xf32, #tpu.memory_space<vmem>>, vector<1x128x1xf32>
      tpu.vector_store %arg6[%c0_32, %c0_33, %c0_34], %44 {strides = array<i32>} : memref<1x128x1xf32, #tpu.memory_space<vmem>>, vector<1x128x1xf32>,
      %cst_35 = arith.constant 0.000000e+00 : f32
      %46 = vector.broadcast %cst_35 : f32 to vector<1x128x1xf32>
      %c0_36 = arith.constant 0 : index
      %c0_37 = arith.constant 0 : index
      %c0_38 = arith.constant 0 : index
      %47 = vector.load %arg7[%c0_36, %c0_37, %c0_38] : memref<1x128x1xf32, #tpu.memory_space<vmem>>, vector<1x128x1xf32>
      tpu.vector_store %arg7[%c0_36, %c0_37, %c0_38], %46 {strides = array<i32>} : memref<1x128x1xf32, #tpu.memory_space<vmem>>, vector<1x128x1xf32>,
      %cst_39 = arith.constant 0.000000e+00 : f32
      %48 = vector.broadcast %cst_39 : f32 to vector<1x128x128xf32>
      %c0_40 = arith.constant 0 : index
      %c0_41 = arith.constant 0 : index
      %c0_42 = arith.constant 0 : index
      %49 = vector.load %arg8[%c0_40, %c0_41, %c0_42] : memref<1x128x128xf32, #tpu.memory_space<vmem>>, vector<1x128x128xf32>
      tpu.vector_store %arg8[%c0_40, %c0_41, %c0_42], %48 {strides = array<i32>} : memref<1x128x128xf32, #tpu.memory_space<vmem>>, vector<1x128x128xf32>,
    } else {
    }
    %c0 = arith.constant 0 : index
    %c0_1 = arith.constant 0 : index
    %c0_2 = arith.constant 0 : index
    %3 = vector.load %arg3[%c0, %c0_1, %c0_2] : memref<1x128x128xf32, #tpu.memory_space<vmem>>, vector<1x128x128xf32>
    %c0_3 = arith.constant 0 : index
    %c0_4 = arith.constant 0 : index
    %c0_5 = arith.constant 0 : index
    %4 = vector.load %arg4[%c0_3, %c0_4, %c0_5] : memref<1x128x128xf32, #tpu.memory_space<vmem>>, vector<1x128x128xf32>
    %cst = arith.constant dense<0.000000e+00> : vector<1x128x128xf32>
    %5 = tpu.matmul %3, %4, %cst {dimension_numbers = #tpu.dot_dimension_numbers<[2], [2], [1], [1], [0, 0, 0, 1, 1, 1], [0], [0]>} : vector<1x128x128xf32>, vector<1x128x128xf32>, vector<1x128x128xf32> -> vector<1x128x128xf32>
    %6 = tpu.iota {dimensions = array<i32: 2>} : vector<1x1x128xi32>
    %c128_i32 = arith.constant 128 : i32
    %7 = arith.muli %arg2, %c128_i32 : i32
    %8 = vector.broadcast %7 : i32 to vector<1x1x128xi32>
    %9 = arith.addi %6, %8 : vector<1x1x128xi32>
    %c8_i32 = arith.constant 8 : i32
    %10 = vector.broadcast %c8_i32 : i32 to vector<1x1x128xi32>
    %11 = arith.cmpi slt, %9, %10 : vector<1x1x128xi32>
    %c0_i32_6 = arith.constant 0 : i32
    %12 = arith.cmpi ne, %arg2, %c0_i32_6 : i32
    %13 = vector.broadcast %12 : i1 to vector<1x1x128xi1>
    %14 = arith.ori %11, %13 : vector<1x1x128xi1>
    %cst_7 = arith.constant -1.000000e+30 : f32
    %15 = vector.shape_cast %14 : vector<1x1x128xi1> to vector<1x1x128xi1>
    %16 = vector.broadcast %15 : vector<1x1x128xi1> to vector<1x128x128xi1>
    %17 = vector.broadcast %cst_7 : f32 to vector<1x128x128xf32>
    %18 = arith.select %16, %5, %17 : vector<1x128x128xi1>, vector<1x128x128xf32>
    %c0_8 = arith.constant 0 : index
    %c0_9 = arith.constant 0 : index
    %c0_10 = arith.constant 0 : index
    %19 = vector.load %arg6[%c0_8, %c0_9, %c0_10] : memref<1x128x1xf32, #tpu.memory_space<vmem>>, vector<1x128x1xf32>
    %cst_11 = arith.constant dense<0xFF800000> : vector<1x128xf32>
    %20 = vector.multi_reduction <maximumf>, %18, %cst_11 [2] : vector<1x128x128xf32> to vector<1x128xf32>
    %21 = vector.shape_cast %20 : vector<1x128xf32> to vector<1x128x1xf32>
    %22 = arith.maximumf %19, %21 : vector<1x128x1xf32>
    %23 = arith.subf %19, %22 : vector<1x128x1xf32>
    %24 = math.exp %23 : vector<1x128x1xf32>
    %25 = vector.broadcast %22 : vector<1x128x1xf32> to vector<1x128x128xf32>
    %26 = arith.subf %18, %25 : vector<1x128x128xf32>
    %27 = math.exp %26 : vector<1x128x128xf32>
    %c0_12 = arith.constant 0 : index
    %c0_13 = arith.constant 0 : index
    %c0_14 = arith.constant 0 : index
    %28 = vector.load %arg7[%c0_12, %c0_13, %c0_14] : memref<1x128x1xf32, #tpu.memory_space<vmem>>, vector<1x128x1xf32>
    %29 = arith.mulf %24, %28 : vector<1x128x1xf32>
    %cst_15 = arith.constant dense<0.000000e+00> : vector<1x128xf32>
    %30 = vector.multi_reduction <add>, %27, %cst_15 [2] : vector<1x128x128xf32> to vector<1x128xf32>
    %31 = vector.shape_cast %30 : vector<1x128xf32> to vector<1x128x1xf32>
    %32 = arith.addf %29, %31 : vector<1x128x1xf32>
    %c0_16 = arith.constant 0 : index
    %c0_17 = arith.constant 0 : index
    %c0_18 = arith.constant 0 : index
    %33 = vector.load %arg7[%c0_16, %c0_17, %c0_18] : memref<1x128x1xf32, #tpu.memory_space<vmem>>, vector<1x128x1xf32>
    tpu.vector_store %arg7[%c0_16, %c0_17, %c0_18], %32 {strides = array<i32>} : memref<1x128x1xf32, #tpu.memory_space<vmem>>, vector<1x128x1xf32>,
    %cst_19 = arith.constant dense<0.000000e+00> : vector<1x128x128xf32>
    %34 = tpu.matmul %27, %4, %cst_19 {dimension_numbers = #tpu.dot_dimension_numbers<[2], [1], [1], [2], [0, 0, 0, 1, 1, 2], [0], [0]>} : vector<1x128x128xf32>, vector<1x128x128xf32>, vector<1x128x128xf32> -> vector<1x128x128xf32>
    %c0_20 = arith.constant 0 : index
    %c0_21 = arith.constant 0 : index
    %c0_22 = arith.constant 0 : index
    %35 = vector.load %arg8[%c0_20, %c0_21, %c0_22] : memref<1x128x128xf32, #tpu.memory_space<vmem>>, vector<1x128x128xf32>
    %36 = vector.broadcast %24 : vector<1x128x1xf32> to vector<1x128x128xf32>
    %37 = arith.mulf %36, %35 : vector<1x128x128xf32>
    %38 = arith.addf %37, %34 : vector<1x128x128xf32>
    %c0_23 = arith.constant 0 : index
    %c0_24 = arith.constant 0 : index
    %c0_25 = arith.constant 0 : index
    %39 = vector.load %arg8[%c0_23, %c0_24, %c0_25] : memref<1x128x128xf32, #tpu.memory_space<vmem>>, vector<1x128x128xf32>
    tpu.vector_store %arg8[%c0_23, %c0_24, %c0_25], %38 {strides = array<i32>} : memref<1x128x128xf32, #tpu.memory_space<vmem>>, vector<1x128x128xf32>,
    %c0_26 = arith.constant 0 : index
    %c0_27 = arith.constant 0 : index
    %c0_28 = arith.constant 0 : index
    %40 = vector.load %arg6[%c0_26, %c0_27, %c0_28] : memref<1x128x1xf32, #tpu.memory_space<vmem>>, vector<1x128x1xf32>
    tpu.vector_store %arg6[%c0_26, %c0_27, %c0_28], %22 {strides = array<i32>} : memref<1x128x1xf32, #tpu.memory_space<vmem>>, vector<1x128x1xf32>,
    %c0_i32_29 = arith.constant 0 : i32
    %41 = arith.cmpi eq, %arg2, %c0_i32_29 : i32
    %42 = arith.extui %41 : i1 to i32
    %c0_i32_30 = arith.constant 0 : i32
    %43 = arith.cmpi ne, %42, %c0_i32_30 : i32
    scf.if %43 {
      %c0_31 = arith.constant 0 : index
      %c0_32 = arith.constant 0 : index
      %c0_33 = arith.constant 0 : index
      %44 = vector.load %arg7[%c0_31, %c0_32, %c0_33] : memref<1x128x1xf32, #tpu.memory_space<vmem>>, vector<1x128x1xf32>
      %45 = tpu.reciprocal %44 : vector<1x128x1xf32> -> vector<1x128x1xf32>
      %c0_34 = arith.constant 0 : index
      %c0_35 = arith.constant 0 : index
      %c0_36 = arith.constant 0 : index
      %46 = vector.load %arg8[%c0_34, %c0_35, %c0_36] : memref<1x128x128xf32, #tpu.memory_space<vmem>>, vector<1x128x128xf32>
      %47 = vector.broadcast %45 : vector<1x128x1xf32> to vector<1x128x128xf32>
      %48 = arith.mulf %46, %47 : vector<1x128x128xf32>
      %c0_37 = arith.constant 0 : index
      %c0_38 = arith.constant 0 : index
      %c0_39 = arith.constant 0 : index
      %49 = vector.load %arg5[%c0_37, %c0_38, %c0_39] : memref<1x128x128xf32, #tpu.memory_space<vmem>>, vector<1x128x128xf32>
      tpu.vector_store %arg5[%c0_37, %c0_38, %c0_39], %48 {strides = array<i32>} : memref<1x128x128xf32, #tpu.memory_space<vmem>>, vector<1x128x128xf32>,
    } else {
    }
    return
  }
  func.func @transform_0(%arg0: i32, %arg1: i32, %arg2: i32) -> (i32, i32, i32) {
    %c0_i32 = arith.constant 0 : i32
    %c0_i32_0 = arith.constant 0 : i32
    return %arg0, %arg1, %c0_i32 : i32, i32, i32
  }
  func.func @transform_1(%arg0: i32, %arg1: i32, %arg2: i32) -> (i32, i32, i32) {
    %c0_i32 = arith.constant 0 : i32
    %c0_i32_0 = arith.constant 0 : i32
    return %arg0, %arg2, %c0_i32 : i32, i32, i32
  }
  func.func @transform_2(%arg0: i32, %arg1: i32, %arg2: i32) -> (i32, i32, i32) {
    %c0_i32 = arith.constant 0 : i32
    %c0_i32_0 = arith.constant 0 : i32
    return %arg0, %arg1, %c0_i32 : i32, i32, i32
  }
}

</mosaic_0001>

<llo_original>
// kernel: dot_product_attention.1
$region0: #{dot_product_attention.1}
  #allocation0 [shape = 'u32[]', space=smem, size = 0x4, offset = 0x4, fixed_abs, tag = 'smem constant byte address 0x4 - core index']
  #allocation1 [shape = 'u32[72,128]{1,0:T(1,128)}', space=vmem, size = 0x9000, scoped, tag = 'internal scratch']
  #allocation2 [shape = 'f32[1,128,1]{2,1,0:T(8,128)}', space=vmem, size = 0x10000, scoped, tag = 'scratch operand']
  #allocation3 [shape = 'f32[1,128,1]{2,1,0:T(8,128)}', space=vmem, size = 0x10000, scoped, tag = 'scratch operand']
  #allocation4 [shape = 'f32[1,128,128]{2,1,0:T(8,128)}', space=vmem, size = 0x10000, scoped, tag = 'scratch operand']
  %s0 = inlined_call_operand.vmem [shape: f32[2,128,128], index: 0, kind: input, shape index: {}, may-alias: {0,1}]
  %s1 = inlined_call_operand.vmem [shape: f32[2,128,128], index: 1, kind: input, shape index: {}, may-alias: {0,1}]
  %s2 = inlined_call_operand.vmem [shape: f32[2,128,128], index: 2, kind: output, shape index: {}]
  %s3 = sld [smem:[#allocation0]]
  $region49: #{dot_product_attention.1} parent=0
    _
  %s5 = ssub.s32 1, %s3
  %s6 = scalar_select 0, %s5, %s3
  loop: start=0, step=1, limit=4
  $region2: #{dot_product_attention.1} parent=0 // loop_pre_header
    _
  $region3: #{dot_product_attention.1} parent=0 // loop_header
    %s8 = sphi 0, %s12
    %p9 = scmp.ge.s32.totalorder %s8, 4
    %s15 = sphi 0, %s34
    %s16 = sphi 0, %s30
    %s17 = sphi 0, %s26
    %s18 = sphi 0, %s15
    %s19 = sphi 0, %s16
    %s20 = sphi 0, %s17
    %s21 = sphi 0, %s18
    %s22 = sphi 0, %s19
    %s23 = sphi 0, %s20
    %s39 = sphi 0, %s41
    %s42 = sphi 0, %s39
    %s43 = sphi 0, %s42
    %s59 = sphi 0, %s43
    %s67 = sphi 0, %s69
    %s70 = sphi 0, %s67
    %s71 = sphi 0, %s70
    %s87 = sphi 0, %s71
    %s95 = sphi 0, %s97
    %s98 = sphi 0, %s95
    %s99 = sphi 0, %s98
    %s115 = sphi 0, %s99
  $region4: #{dot_product_attention.1} parent=0 // loop_header_branch
    %11 = sbr.rel (%p9) target = $region8
  $region5: #{dot_product_attention.1} parent=0 // loop_body
    %s13 = ssub.s32 %s8, 1
    %s14 = ssub.s32 %s8, 2
    %s24 = sadd.s32 1, %s17
    %p25 = scmp.ge.s32.totalorder %s24, 1
    %s26 = scalar_select %p25, 0, %s24
    %s27 = sadd.s32 1, %s16
    %s28 = scalar_select %p25, %s27, %s16
    %p29 = scmp.ge.s32.totalorder %s28, 1
    %s30 = scalar_select %p29, 0, %s28
    %s31 = sadd.s32 1, %s15
    %s32 = scalar_select %p29, %s31, %s15
    %p33 = scmp.ge.s32.totalorder %s32, 2
    %s34 = scalar_select %p33, 0, %s32
    %s35 = ssub.s32 %s15, %s34
    %s36 = ssub.s32 %s16, %s30
    %s37 = sor.u32 %s35, %s36
    %p38 = scmp.eq.s32.totalorder %s37, 0
    %s40 = sadd.s32 %s39, 1
    %s41 = scalar_select %p38, %s39, %s40
    %p44 = pneg %p38
    %p45 = scmp.eq.s32.totalorder %s8, 1
    %p46 = por %p44, %p45
    %p47 = scmp.ne.s32.totalorder %s39, %s42
    %p48 = scmp.eq.s32.totalorder %s8, 0
    %p49 = por %p47, %p48
    %p50 = scmp.ne.s32.totalorder %s39, %s42
    %p51 = scmp.eq.s32.totalorder %s13, 1
    %p52 = por %p50, %p51
    %p53 = scmp.ne.s32.totalorder %s42, %s43
    %p54 = scmp.eq.s32.totalorder %s13, 0
    %p55 = por %p53, %p54
    %p56 = scmp.ne.s32.totalorder %s42, %s43
    %p57 = scmp.eq.s32.totalorder %s14, 1
    %p58 = por %p56, %p57
    %p60 = scmp.ne.s32.totalorder %s43, %s59
    %p61 = scmp.eq.s32.totalorder %s14, 0
    %p62 = por %p60, %p61
    %s63 = ssub.s32 %s15, %s34
    %s64 = ssub.s32 %s17, %s26
    %s65 = sor.u32 %s63, %s64
    %p66 = scmp.eq.s32.totalorder %s65, 0
    %s68 = sadd.s32 %s67, 1
    %s69 = scalar_select %p66, %s67, %s68
    %p72 = pneg %p66
    %p73 = scmp.eq.s32.totalorder %s8, 1
    %p74 = por %p72, %p73
    %p75 = scmp.ne.s32.totalorder %s67, %s70
    %p76 = scmp.eq.s32.totalorder %s8, 0
    %p77 = por %p75, %p76
    %p78 = scmp.ne.s32.totalorder %s67, %s70
    %p79 = scmp.eq.s32.totalorder %s13, 1
    %p80 = por %p78, %p79
    %p81 = scmp.ne.s32.totalorder %s70, %s71
    %p82 = scmp.eq.s32.totalorder %s13, 0
    %p83 = por %p81, %p82
    %p84 = scmp.ne.s32.totalorder %s70, %s71
    %p85 = scmp.eq.s32.totalorder %s14, 1
    %p86 = por %p84, %p85
    %p88 = scmp.ne.s32.totalorder %s71, %s87
    %p89 = scmp.eq.s32.totalorder %s14, 0
    %p90 = por %p88, %p89
    %s91 = ssub.s32 %s15, %s34
    %s92 = ssub.s32 %s16, %s30
    %s93 = sor.u32 %s91, %s92
    %p94 = scmp.eq.s32.totalorder %s93, 0
    %s96 = sadd.s32 %s95, 1
    %s97 = scalar_select %p94, %s95, %s96
    %p100 = pneg %p94
    %p101 = scmp.eq.s32.totalorder %s8, 1
    %p102 = por %p100, %p101
    %p103 = scmp.ne.s32.totalorder %s95, %s98
    %p104 = scmp.eq.s32.totalorder %s8, 0
    %p105 = por %p103, %p104
    %p106 = scmp.ne.s32.totalorder %s95, %s98
    %p107 = scmp.eq.s32.totalorder %s13, 1
    %p108 = por %p106, %p107
    %p109 = scmp.ne.s32.totalorder %s98, %s99
    %p110 = scmp.eq.s32.totalorder %s13, 0
    %p111 = por %p109, %p110
    %p112 = scmp.ne.s32.totalorder %s98, %s99
    %p113 = scmp.eq.s32.totalorder %s14, 1
    %p114 = por %p112, %p113
    %p116 = scmp.ne.s32.totalorder %s99, %s115
    %p117 = scmp.eq.s32.totalorder %s14, 0
    %p118 = por %p116, %p117
    %p119 = scmp.le.s32.totalorder 1, %s8
    %p120 = scmp.lt.s32.totalorder %s8, 3
    %p121 = pnand %p119, %p120
    %p122 = pneg %p121
    // Predicated region
    $region9: #{dot_product_attention.1} parent=5 // pred_check
      _
    $region10: #{dot_product_attention.1} parent=5 // pred_check_branch
      %124 = sbr.rel (%p121) target = $region12
    $region11: #{dot_product_attention.1} parent=5 // pred_region
      %s125 = ssub.s32 %s8, 1
    $region12: #{dot_product_attention.1} parent=5 // pred_fallthru
      _
    %p126 = scmp.lt.s32.totalorder %s8, 2
    // Predicated region
    $region13: #{dot_product_attention.1} parent=5 // pred_check
      %p127 = pneg %p126
    $region14: #{dot_product_attention.1} parent=5 // pred_check_branch
      %129 = sbr.rel (%p127) target = $region16
    $region15: #{dot_product_attention.1} parent=5 // pred_region
      // Predicated region
      $region17: #{dot_product_attention.1} parent=15 // pred_check
        %p130 = pneg %p49
      $region18: #{dot_product_attention.1} parent=15 // pred_check_branch
        %132 = sbr.rel (%p130) target = $region20
      $region19: #{dot_product_attention.1} parent=15 // pred_region
        %s133 = smul.u32 16, %s16
        %p134 = scmp.lt.s32.totalorder %s15, 1
        %s135 = scalar_select %p134, %s15, 1
        %p136 = scmp.lt.s32.totalorder %s133, 15
        %s137 = scalar_select %p136, %s133, 15
        %s138 = smul.addr %s135, 16
        %s139 = sadd.s32 %s137, %s138
        %s140 = smul.addr %s139, 8
        %s141 = scalar_lea.vmem %s0, %s140
        %s142 = smul.u32 16, %s16
      $region20: #{dot_product_attention.1} parent=15 // pred_fallthru
        _
      // Predicated region
      $region21: #{dot_product_attention.1} parent=15 // pred_check
        %p143 = pneg %p77
      $region22: #{dot_product_attention.1} parent=15 // pred_check_branch
        %145 = sbr.rel (%p143) target = $region24
      $region23: #{dot_product_attention.1} parent=15 // pred_region
        %s146 = smul.u32 16, %s17
        %p147 = scmp.lt.s32.totalorder %s15, 1
        %s148 = scalar_select %p147, %s15, 1
        %p149 = scmp.lt.s32.totalorder %s146, 15
        %s150 = scalar_select %p149, %s146, 15
        %s151 = smul.addr %s148, 16
        %s152 = sadd.s32 %s150, %s151
        %s153 = smul.addr %s152, 8
        %s154 = scalar_lea.vmem %s1, %s153
        %s155 = smul.u32 16, %s17
      $region24: #{dot_product_attention.1} parent=15 // pred_fallthru
        _
    $region16: #{dot_product_attention.1} parent=5 // pred_fallthru
      _
    %p156 = scmp.le.s32.totalorder 1, %s8
    %p157 = scmp.lt.s32.totalorder %s8, 3
    %p158 = pnand %p156, %p157
    %p159 = pneg %p158
    // Predicated region
    $region25: #{dot_product_attention.1} parent=5 // pred_check
      _
    $region26: #{dot_product_attention.1} parent=5 // pred_check_branch
      %161 = sbr.rel (%p158) target = $region28
    $region27: #{dot_product_attention.1} parent=5 // pred_region
      %s162 = ssub.s32 %s8, 1
      %s163 = smul.u32 16, %s19
      %p164 = scmp.lt.s32.totalorder %s18, 1
      %s165 = scalar_select %p164, %s18, 1
      %p166 = scmp.lt.s32.totalorder %s163, 15
      %s167 = scalar_select %p166, %s163, 15
      %s168 = smul.addr %s165, 16
      %s169 = sadd.s32 %s167, %s168
      %s170 = smul.addr %s169, 8
      %s171 = scalar_lea.vmem %s0, %s170
      %p172 = pneg %p55
      %p173 = pneg %p52
      %s174 = smul.u32 16, %s20
      %p175 = scmp.lt.s32.totalorder %s18, 1
      %s176 = scalar_select %p175, %s18, 1
      %p177 = scmp.lt.s32.totalorder %s174, 15
      %s178 = scalar_select %p177, %s174, 15
      %s179 = smul.addr %s176, 16
      %s180 = sadd.s32 %s178, %s179
      %s181 = smul.addr %s180, 8
      %s182 = scalar_lea.vmem %s1, %s181
      %p183 = pneg %p83
      %p184 = pneg %p80
      %p185 = pneg %p111
      %p186 = pneg %p108
      %s187 = smul.u32 16, %s19
      %p188 = scmp.lt.s32.totalorder %s18, 1
      %s189 = scalar_select %p188, %s18, 1
      %p190 = scmp.lt.s32.totalorder %s187, 15
      %s191 = scalar_select %p190, %s187, 15
      %s192 = smul.addr %s189, 16
      %s193 = sadd.s32 %s191, %s192
      %s194 = smul.addr %s193, 8
      %s195 = scalar_lea.vmem %s2, %s194
      %s196 = smul.u32 16, %s19
      %p197 = scmp.lt.s32.totalorder %s18, 1
      %s198 = scalar_select %p197, %s18, 1
      %p199 = scmp.lt.s32.totalorder %s196, 15
      %s200 = scalar_select %p199, %s196, 15
      %s201 = smul.addr %s198, 16
      %s202 = sadd.s32 %s200, %s201
      %s203 = smul.addr %s202, 8
      %s204 = scalar_lea.vmem %s0, %s203
      %s205 = smul.u32 16, %s19
      %s206 = smul.u32 16, %s20
      %p207 = scmp.lt.s32.totalorder %s18, 1
      %s208 = scalar_select %p207, %s18, 1
      %p209 = scmp.lt.s32.totalorder %s206, 15
      %s210 = scalar_select %p209, %s206, 15
      %s211 = smul.addr %s208, 16
      %s212 = sadd.s32 %s210, %s211
      %s213 = smul.addr %s212, 8
      %s214 = scalar_lea.vmem %s1, %s213
      %s215 = smul.u32 16, %s20
      %s216 = smul.u32 16, %s19
      %p217 = scmp.lt.s32.totalorder %s18, 1
      %s218 = scalar_select %p217, %s18, 1
      %p219 = scmp.lt.s32.totalorder %s216, 15
      %s220 = scalar_select %p219, %s216, 15
      %s221 = smul.addr %s218, 16
      %s222 = sadd.s32 %s220, %s221
      %s223 = smul.addr %s222, 8
      %s224 = scalar_lea.vmem %s2, %s223
      %s225 = smul.u32 16, %s19
      %p226 = scmp.eq.s32.totalorder %s20, 0
      // Predicated region
      $region29: #{dot_product_attention.1} parent=27 // pred_check
        %p227 = pneg %p226
      $region30: #{dot_product_attention.1} parent=27 // pred_check_branch
        %229 = sbr.rel (%p227) target = $region32
      $region31: #{dot_product_attention.1} parent=27 // pred_region
        %vm230 = vcmask 7168
        %231 = vst.msk [vmem:[#allocation2] sm:$0xff] %vm230, -inf
        %232 = vst.msk [vmem:[#allocation2 + $0x8] sm:$0xff] %vm230, -inf
        %233 = vst.msk [vmem:[#allocation2 + $0x10] sm:$0xff] %vm230, -inf
        %234 = vst.msk [vmem:[#allocation2 + $0x18] sm:$0xff] %vm230, -inf
        %235 = vst.msk [vmem:[#allocation2 + $0x20] sm:$0xff] %vm230, -inf
        %236 = vst.msk [vmem:[#allocation2 + $0x28] sm:$0xff] %vm230, -inf
        %237 = vst.msk [vmem:[#allocation2 + $0x30] sm:$0xff] %vm230, -inf
        %238 = vst.msk [vmem:[#allocation2 + $0x38] sm:$0xff] %vm230, -inf
        %239 = vst.msk [vmem:[#allocation2 + $0x40] sm:$0xff] %vm230, -inf
        %240 = vst.msk [vmem:[#allocation2 + $0x48] sm:$0xff] %vm230, -inf
        %241 = vst.msk [vmem:[#allocation2 + $0x50] sm:$0xff] %vm230, -inf
        %242 = vst.msk [vmem:[#allocation2 + $0x58] sm:$0xff] %vm230, -inf
        %243 = vst.msk [vmem:[#allocation2 + $0x60] sm:$0xff] %vm230, -inf
        %244 = vst.msk [vmem:[#allocation2 + $0x68] sm:$0xff] %vm230, -inf
        %245 = vst.msk [vmem:[#allocation2 + $0x70] sm:$0xff] %vm230, -inf
        %246 = vst.msk [vmem:[#allocation2 + $0x78] sm:$0xff] %vm230, -inf
        %247 = vst.msk [vmem:[#allocation3] sm:$0xff] %vm230, 0.0
        %248 = vst.msk [vmem:[#allocation3 + $0x8] sm:$0xff] %vm230, 0.0
        %249 = vst.msk [vmem:[#allocation3 + $0x10] sm:$0xff] %vm230, 0.0
        %250 = vst.msk [vmem:[#allocation3 + $0x18] sm:$0xff] %vm230, 0.0
        %251 = vst.msk [vmem:[#allocation3 + $0x20] sm:$0xff] %vm230, 0.0
        %252 = vst.msk [vmem:[#allocation3 + $0x28] sm:$0xff] %vm230, 0.0
        %253 = vst.msk [vmem:[#allocation3 + $0x30] sm:$0xff] %vm230, 0.0
        %254 = vst.msk [vmem:[#allocation3 + $0x38] sm:$0xff] %vm230, 0.0
        %255 = vst.msk [vmem:[#allocation3 + $0x40] sm:$0xff] %vm230, 0.0
        %256 = vst.msk [vmem:[#allocation3 + $0x48] sm:$0xff] %vm230, 0.0
        %257 = vst.msk [vmem:[#allocation3 + $0x50] sm:$0xff] %vm230, 0.0
        %258 = vst.msk [vmem:[#allocation3 + $0x58] sm:$0xff] %vm230, 0.0
        %259 = vst.msk [vmem:[#allocation3 + $0x60] sm:$0xff] %vm230, 0.0
        %260 = vst.msk [vmem:[#allocation3 + $0x68] sm:$0xff] %vm230, 0.0
        %261 = vst.msk [vmem:[#allocation3 + $0x70] sm:$0xff] %vm230, 0.0
        %262 = vst.msk [vmem:[#allocation3 + $0x78] sm:$0xff] %vm230, 0.0
        %263 = vst [vmem:[#allocation4] sm:$0xff] 0.0
        %264 = vst [vmem:[#allocation4 + $0x8] sm:$0xff] 0.0
        %265 = vst [vmem:[#allocation4 + $0x10] sm:$0xff] 0.0
        %266 = vst [vmem:[#allocation4 + $0x18] sm:$0xff] 0.0
        %267 = vst [vmem:[#allocation4 + $0x20] sm:$0xff] 0.0
        %268 = vst [vmem:[#allocation4 + $0x28] sm:$0xff] 0.0
        %269 = vst [vmem:[#allocation4 + $0x30] sm:$0xff] 0.0
        %270 = vst [vmem:[#allocation4 + $0x38] sm:$0xff] 0.0
        %271 = vst [vmem:[#allocation4 + $0x40] sm:$0xff] 0.0
        %272 = vst [vmem:[#allocation4 + $0x48] sm:$0xff] 0.0
        %273 = vst [vmem:[#allocation4 + $0x50] sm:$0xff] 0.0
        %274 = vst [vmem:[#allocation4 + $0x58] sm:$0xff] 0.0
        %275 = vst [vmem:[#allocation4 + $0x60] sm:$0xff] 0.0
        %276 = vst [vmem:[#allocation4 + $0x68] sm:$0xff] 0.0
        %277 = vst [vmem:[#allocation4 + $0x70] sm:$0xff] 0.0
        %278 = vst [vmem:[#allocation4 + $0x78] sm:$0xff] 0.0
      $region32: #{dot_product_attention.1} parent=27 // pred_fallthru
        _
      %v279 = vld [vmem:[%s204] sm:$0xff]
      %v280 = vld [vmem:[%s204 + $0x8] sm:$0xff]
      %v281 = vld [vmem:[%s204 + $0x10] sm:$0xff]
      %v282 = vld [vmem:[%s204 + $0x18] sm:$0xff]
      %v283 = vld [vmem:[%s204 + $0x20] sm:$0xff]
      %v284 = vld [vmem:[%s204 + $0x28] sm:$0xff]
      %v285 = vld [vmem:[%s204 + $0x30] sm:$0xff]
      %v286 = vld [vmem:[%s204 + $0x38] sm:$0xff]
      %v287 = vld [vmem:[%s204 + $0x40] sm:$0xff]
      %v288 = vld [vmem:[%s204 + $0x48] sm:$0xff]
      %v289 = vld [vmem:[%s204 + $0x50] sm:$0xff]
      %v290 = vld [vmem:[%s204 + $0x58] sm:$0xff]
      %v291 = vld [vmem:[%s204 + $0x60] sm:$0xff]
      %v292 = vld [vmem:[%s204 + $0x68] sm:$0xff]
      %v293 = vld [vmem:[%s204 + $0x70] sm:$0xff]
      %v294 = vld [vmem:[%s204 + $0x78] sm:$0xff]
      %v295 = vld [vmem:[%s214] sm:$0xff]
      %v296 = vld [vmem:[%s214 + $0x8] sm:$0xff]
      %v297 = vld [vmem:[%s214 + $0x10] sm:$0xff]
      %v298 = vld [vmem:[%s214 + $0x18] sm:$0xff]
      %v299 = vld [vmem:[%s214 + $0x20] sm:$0xff]
      %v300 = vld [vmem:[%s214 + $0x28] sm:$0xff]
      %v301 = vld [vmem:[%s214 + $0x30] sm:$0xff]
      %v302 = vld [vmem:[%s214 + $0x38] sm:$0xff]
      %v303 = vld [vmem:[%s214 + $0x40] sm:$0xff]
      %v304 = vld [vmem:[%s214 + $0x48] sm:$0xff]
      %v305 = vld [vmem:[%s214 + $0x50] sm:$0xff]
      %v306 = vld [vmem:[%s214 + $0x58] sm:$0xff]
      %v307 = vld [vmem:[%s214 + $0x60] sm:$0xff]
      %v308 = vld [vmem:[%s214 + $0x68] sm:$0xff]
      %v309 = vld [vmem:[%s214 + $0x70] sm:$0xff]
      %v310 = vld [vmem:[%s214 + $0x78] sm:$0xff]
      %311 = vmatpush.xpose.msra.mxu0 %v310
      %312 = vmatpush.xpose.msra.mxu0 %v309
      %313 = vmatpush.xpose.msra.mxu0 %v308
      %314 = vmatpush.xpose.msra.mxu0 %v307
      %315 = vmatpush.xpose.msra.mxu0 %v306
      %316 = vmatpush.xpose.msra.mxu0 %v305
      %317 = vmatpush.xpose.msra.mxu0 %v304
      %318 = vmatpush.xpose.msra.mxu0 %v303
      %319 = vmatpush.xpose.msra.mxu0 %v302
      %320 = vmatpush.xpose.msra.mxu0 %v301
      %321 = vmatpush.xpose.msra.mxu0 %v300
      %322 = vmatpush.xpose.msra.mxu0 %v299
      %323 = vmatpush.xpose.msra.mxu0 %v298
      %324 = vmatpush.xpose.msra.mxu0 %v297
      %325 = vmatpush.xpose.msra.mxu0 %v296
      %326 = vmatpush.xpose.msra.mxu0 %v295
      %327 = vmatmul.f32.gmra.mxu0 %v279
      %v328 = vpop.f32.mrf.mxu0
      %v329 = vadd.f32 0.0, %v328
      %330 = vmatmul.f32.gmra.mxu0 %v280
      %v331 = vpop.f32.mrf.mxu0
      %v332 = vadd.f32 0.0, %v331
      %333 = vmatmul.f32.gmra.mxu0 %v281
      %v334 = vpop.f32.mrf.mxu0
      %v335 = vadd.f32 0.0, %v334
      %336 = vmatmul.f32.gmra.mxu0 %v282
      %v337 = vpop.f32.mrf.mxu0
      %v338 = vadd.f32 0.0, %v337
      %339 = vmatmul.f32.gmra.mxu0 %v283
      %v340 = vpop.f32.mrf.mxu0
      %v341 = vadd.f32 0.0, %v340
      %342 = vmatmul.f32.gmra.mxu0 %v284
      %v343 = vpop.f32.mrf.mxu0
      %v344 = vadd.f32 0.0, %v343
      %345 = vmatmul.f32.gmra.mxu0 %v285
      %v346 = vpop.f32.mrf.mxu0
      %v347 = vadd.f32 0.0, %v346
      %348 = vmatmul.f32.gmra.mxu0 %v286
      %v349 = vpop.f32.mrf.mxu0
      %v350 = vadd.f32 0.0, %v349
      %351 = vmatmul.f32.gmra.mxu0 %v287
      %v352 = vpop.f32.mrf.mxu0
      %v353 = vadd.f32 0.0, %v352
      %354 = vmatmul.f32.gmra.mxu0 %v288
      %v355 = vpop.f32.mrf.mxu0
      %v356 = vadd.f32 0.0, %v355
      %357 = vmatmul.f32.gmra.mxu0 %v289
      %v358 = vpop.f32.mrf.mxu0
      %v359 = vadd.f32 0.0, %v358
      %360 = vmatmul.f32.gmra.mxu0 %v290
      %v361 = vpop.f32.mrf.mxu0
      %v362 = vadd.f32 0.0, %v361
      %363 = vmatmul.f32.gmra.mxu0 %v291
      %v364 = vpop.f32.mrf.mxu0
      %v365 = vadd.f32 0.0, %v364
      %366 = vmatmul.f32.gmra.mxu0 %v292
      %v367 = vpop.f32.mrf.mxu0
      %v368 = vadd.f32 0.0, %v367
      %369 = vmatmul.f32.gmra.mxu0 %v293
      %v370 = vpop.f32.mrf.mxu0
      %v371 = vadd.f32 0.0, %v370
      %372 = vmatmul.f32.gmra.mxu0 %v294
      %v373 = vpop.f32.mrf.mxu0
      %v374 = vadd.f32 0.0, %v373
      %375 = vdwg.mxu0
      %v376 = vlaneseq
      %v377 = vand.u32 %v376, 127
      %s378 = smul.u32 %s20, 128
      %v379 = vstv %s378
      %v380 = vadd.s32 %v377, %v379
      %vm381 = vcmp.lt.s32.totalorder %v380, 8
      %p382 = scmp.ne.s32.totalorder %s20, 0
      %s383 = scalar_select %p382, 1, 0
      %v384 = vstv %s383
      %vm385 = vcmp.eq.s32.totalorder %v384, 1
      %vm386 = vmor %vm381, %vm385
      %v387 = vsel %vm386, 1, 0
      %vm388 = vcmp.eq.s32.totalorder %v387, 1
      %v389 = vsel %vm388, %v329, -1e+30
      %v390 = vsel %vm388, %v332, -1e+30
      %v391 = vsel %vm388, %v335, -1e+30
      %v392 = vsel %vm388, %v338, -1e+30
      %v393 = vsel %vm388, %v341, -1e+30
      %v394 = vsel %vm388, %v344, -1e+30
      %v395 = vsel %vm388, %v347, -1e+30
      %v396 = vsel %vm388, %v350, -1e+30
      %v397 = vsel %vm388, %v353, -1e+30
      %v398 = vsel %vm388, %v356, -1e+30
      %v399 = vsel %vm388, %v359, -1e+30
      %v400 = vsel %vm388, %v362, -1e+30
      %v401 = vsel %vm388, %v365, -1e+30
      %v402 = vsel %vm388, %v368, -1e+30
      %v403 = vsel %vm388, %v371, -1e+30
      %v404 = vsel %vm388, %v374, -1e+30
      %v405 = vld [vmem:[#allocation2] sm:$0xff]
      %v406 = vld [vmem:[#allocation2 + $0x8] sm:$0xff]
      %v407 = vld [vmem:[#allocation2 + $0x10] sm:$0xff]
      %v408 = vld [vmem:[#allocation2 + $0x18] sm:$0xff]
      %v409 = vld [vmem:[#allocation2 + $0x20] sm:$0xff]
      %v410 = vld [vmem:[#allocation2 + $0x28] sm:$0xff]
      %v411 = vld [vmem:[#allocation2 + $0x30] sm:$0xff]
      %v412 = vld [vmem:[#allocation2 + $0x38] sm:$0xff]
      %v413 = vld [vmem:[#allocation2 + $0x40] sm:$0xff]
      %v414 = vld [vmem:[#allocation2 + $0x48] sm:$0xff]
      %v415 = vld [vmem:[#allocation2 + $0x50] sm:$0xff]
      %v416 = vld [vmem:[#allocation2 + $0x58] sm:$0xff]
      %v417 = vld [vmem:[#allocation2 + $0x60] sm:$0xff]
      %v418 = vld [vmem:[#allocation2 + $0x68] sm:$0xff]
      %v419 = vld [vmem:[#allocation2 + $0x70] sm:$0xff]
      %v420 = vld [vmem:[#allocation2 + $0x78] sm:$0xff]
      %421 = vmax.xlane.f32.xlu0 %v389
      %v422 = vpop.xlane.xlu0 %421
      %423 = vmax.xlane.f32.xlu0 %v390
      %v424 = vpop.xlane.xlu0 %423
      %425 = vmax.xlane.f32.xlu0 %v391
      %v426 = vpop.xlane.xlu0 %425
      %427 = vmax.xlane.f32.xlu0 %v392
      %v428 = vpop.xlane.xlu0 %427
      %429 = vmax.xlane.f32.xlu0 %v393
      %v430 = vpop.xlane.xlu0 %429
      %431 = vmax.xlane.f32.xlu0 %v394
      %v432 = vpop.xlane.xlu0 %431
      %433 = vmax.xlane.f32.xlu0 %v395
      %v434 = vpop.xlane.xlu0 %433
      %435 = vmax.xlane.f32.xlu0 %v396
      %v436 = vpop.xlane.xlu0 %435
      %437 = vmax.xlane.f32.xlu0 %v397
      %v438 = vpop.xlane.xlu0 %437
      %439 = vmax.xlane.f32.xlu0 %v398
      %v440 = vpop.xlane.xlu0 %439
      %441 = vmax.xlane.f32.xlu0 %v399
      %v442 = vpop.xlane.xlu0 %441
      %443 = vmax.xlane.f32.xlu0 %v400
      %v444 = vpop.xlane.xlu0 %443
      %445 = vmax.xlane.f32.xlu0 %v401
      %v446 = vpop.xlane.xlu0 %445
      %447 = vmax.xlane.f32.xlu0 %v402
      %v448 = vpop.xlane.xlu0 %447
      %449 = vmax.xlane.f32.xlu0 %v403
      %v450 = vpop.xlane.xlu0 %449
      %451 = vmax.xlane.f32.xlu0 %v404
      %v452 = vpop.xlane.xlu0 %451
      %v453 = vmax.f32 %v405, %v422
      %v454 = vmax.f32 %v406, %v424
      %v455 = vmax.f32 %v407, %v426
      %v456 = vmax.f32 %v408, %v428
      %v457 = vmax.f32 %v409, %v430
      %v458 = vmax.f32 %v410, %v432
      %v459 = vmax.f32 %v411, %v434
      %v460 = vmax.f32 %v412, %v436
      %v461 = vmax.f32 %v413, %v438
      %v462 = vmax.f32 %v414, %v440
      %v463 = vmax.f32 %v415, %v442
      %v464 = vmax.f32 %v416, %v444
      %v465 = vmax.f32 %v417, %v446
      %v466 = vmax.f32 %v418, %v448
      %v467 = vmax.f32 %v419, %v450
      %v468 = vmax.f32 %v420, %v452
      %v469 = vsub.f32 %v405, %v453
      %v470 = vsub.f32 %v406, %v454
      %v471 = vsub.f32 %v407, %v455
      %v472 = vsub.f32 %v408, %v456
      %v473 = vsub.f32 %v409, %v457
      %v474 = vsub.f32 %v410, %v458
      %v475 = vsub.f32 %v411, %v459
      %v476 = vsub.f32 %v412, %v460
      %v477 = vsub.f32 %v413, %v461
      %v478 = vsub.f32 %v414, %v462
      %v479 = vsub.f32 %v415, %v463
      %v480 = vsub.f32 %v416, %v464
      %v481 = vsub.f32 %v417, %v465
      %v482 = vsub.f32 %v418, %v466
      %v483 = vsub.f32 %v419, %v467
      %v484 = vsub.f32 %v420, %v468
      %v485 = vmul.f32 %v469, 1.442695
      %v486 = vpow.pop %v485
      %v487 = vmul.f32 %v470, 1.442695
      %v488 = vpow.pop %v487
      %v489 = vmul.f32 %v471, 1.442695
      %v490 = vpow.pop %v489
      %v491 = vmul.f32 %v472, 1.442695
      %v492 = vpow.pop %v491
      %v493 = vmul.f32 %v473, 1.442695
      %v494 = vpow.pop %v493
      %v495 = vmul.f32 %v474, 1.442695
      %v496 = vpow.pop %v495
      %v497 = vmul.f32 %v475, 1.442695
      %v498 = vpow.pop %v497
      %v499 = vmul.f32 %v476, 1.442695
      %v500 = vpow.pop %v499
      %v501 = vmul.f32 %v477, 1.442695
      %v502 = vpow.pop %v501
      %v503 = vmul.f32 %v478, 1.442695
      %v504 = vpow.pop %v503
      %v505 = vmul.f32 %v479, 1.442695
      %v506 = vpow.pop %v505
      %v507 = vmul.f32 %v480, 1.442695
      %v508 = vpow.pop %v507
      %v509 = vmul.f32 %v481, 1.442695
      %v510 = vpow.pop %v509
      %v511 = vmul.f32 %v482, 1.442695
      %v512 = vpow.pop %v511
      %v513 = vmul.f32 %v483, 1.442695
      %v514 = vpow.pop %v513
      %v515 = vmul.f32 %v484, 1.442695
      %v516 = vpow.pop %v515
      %518 = vset.pattern.permute.xlu0 0
      %519 = vperm.xlu0 %518, %v453
      %v520 = vpop.permute.xlu0 %519
      %523 = vset.pattern.permute.xlu0 0
      %524 = vperm.xlu0 %523, %v454
      %v525 = vpop.permute.xlu0 %524
      %528 = vset.pattern.permute.xlu0 0
      %529 = vperm.xlu0 %528, %v455
      %v530 = vpop.permute.xlu0 %529
      %533 = vset.pattern.permute.xlu0 0
      %534 = vperm.xlu0 %533, %v456
      %v535 = vpop.permute.xlu0 %534
      %538 = vset.pattern.permute.xlu0 0
      %539 = vperm.xlu0 %538, %v457
      %v540 = vpop.permute.xlu0 %539
      %543 = vset.pattern.permute.xlu0 0
      %544 = vperm.xlu0 %543, %v458
      %v545 = vpop.permute.xlu0 %544
      %548 = vset.pattern.permute.xlu0 0
      %549 = vperm.xlu0 %548, %v459
      %v550 = vpop.permute.xlu0 %549
      %553 = vset.pattern.permute.xlu0 0
      %554 = vperm.xlu0 %553, %v460
      %v555 = vpop.permute.xlu0 %554
      %558 = vset.pattern.permute.xlu0 0
      %559 = vperm.xlu0 %558, %v461
      %v560 = vpop.permute.xlu0 %559
      %563 = vset.pattern.permute.xlu0 0
      %564 = vperm.xlu0 %563, %v462
      %v565 = vpop.permute.xlu0 %564
      %568 = vset.pattern.permute.xlu0 0
      %569 = vperm.xlu0 %568, %v463
      %v570 = vpop.permute.xlu0 %569
      %573 = vset.pattern.permute.xlu0 0
      %574 = vperm.xlu0 %573, %v464
      %v575 = vpop.permute.xlu0 %574
      %578 = vset.pattern.permute.xlu0 0
      %579 = vperm.xlu0 %578, %v465
      %v580 = vpop.permute.xlu0 %579
      %583 = vset.pattern.permute.xlu0 0
      %584 = vperm.xlu0 %583, %v466
      %v585 = vpop.permute.xlu0 %584
      %588 = vset.pattern.permute.xlu0 0
      %589 = vperm.xlu0 %588, %v467
      %v590 = vpop.permute.xlu0 %589
      %593 = vset.pattern.permute.xlu0 0
      %594 = vperm.xlu0 %593, %v468
      %v595 = vpop.permute.xlu0 %594
      %v597 = vsub.f32 %v389, %v520
      %v598 = vsub.f32 %v390, %v525
      %v599 = vsub.f32 %v391, %v530
      %v600 = vsub.f32 %v392, %v535
      %v601 = vsub.f32 %v393, %v540
      %v602 = vsub.f32 %v394, %v545
      %v603 = vsub.f32 %v395, %v550
      %v604 = vsub.f32 %v396, %v555
      %v605 = vsub.f32 %v397, %v560
      %v606 = vsub.f32 %v398, %v565
      %v607 = vsub.f32 %v399, %v570
      %v608 = vsub.f32 %v400, %v575
      %v609 = vsub.f32 %v401, %v580
      %v610 = vsub.f32 %v402, %v585
      %v611 = vsub.f32 %v403, %v590
      %v612 = vsub.f32 %v404, %v595
      %v613 = vmul.f32 %v597, 1.442695
      %v614 = vpow.pop %v613
      %v615 = vmul.f32 %v598, 1.442695
      %v616 = vpow.pop %v615
      %v617 = vmul.f32 %v599, 1.442695
      %v618 = vpow.pop %v617
      %v619 = vmul.f32 %v600, 1.442695
      %v620 = vpow.pop %v619
      %v621 = vmul.f32 %v601, 1.442695
      %v622 = vpow.pop %v621
      %v623 = vmul.f32 %v602, 1.442695
      %v624 = vpow.pop %v623
      %v625 = vmul.f32 %v603, 1.442695
      %v626 = vpow.pop %v625
      %v627 = vmul.f32 %v604, 1.442695
      %v628 = vpow.pop %v627
      %v629 = vmul.f32 %v605, 1.442695
      %v630 = vpow.pop %v629
      %v631 = vmul.f32 %v606, 1.442695
      %v632 = vpow.pop %v631
      %v633 = vmul.f32 %v607, 1.442695
      %v634 = vpow.pop %v633
      %v635 = vmul.f32 %v608, 1.442695
      %v636 = vpow.pop %v635
      %v637 = vmul.f32 %v609, 1.442695
      %v638 = vpow.pop %v637
      %v639 = vmul.f32 %v610, 1.442695
      %v640 = vpow.pop %v639
      %v641 = vmul.f32 %v611, 1.442695
      %v642 = vpow.pop %v641
      %v643 = vmul.f32 %v612, 1.442695
      %v644 = vpow.pop %v643
      %v645 = vld [vmem:[#allocation3] sm:$0xff]
      %v646 = vld [vmem:[#allocation3 + $0x8] sm:$0xff]
      %v647 = vld [vmem:[#allocation3 + $0x10] sm:$0xff]
      %v648 = vld [vmem:[#allocation3 + $0x18] sm:$0xff]
      %v649 = vld [vmem:[#allocation3 + $0x20] sm:$0xff]
      %v650 = vld [vmem:[#allocation3 + $0x28] sm:$0xff]
      %v651 = vld [vmem:[#allocation3 + $0x30] sm:$0xff]
      %v652 = vld [vmem:[#allocation3 + $0x38] sm:$0xff]
      %v653 = vld [vmem:[#allocation3 + $0x40] sm:$0xff]
      %v654 = vld [vmem:[#allocation3 + $0x48] sm:$0xff]
      %v655 = vld [vmem:[#allocation3 + $0x50] sm:$0xff]
      %v656 = vld [vmem:[#allocation3 + $0x58] sm:$0xff]
      %v657 = vld [vmem:[#allocation3 + $0x60] sm:$0xff]
      %v658 = vld [vmem:[#allocation3 + $0x68] sm:$0xff]
      %v659 = vld [vmem:[#allocation3 + $0x70] sm:$0xff]
      %v660 = vld [vmem:[#allocation3 + $0x78] sm:$0xff]
      %v661 = vmul.f32 %v486, %v645
      %v662 = vmul.f32 %v488, %v646
      %v663 = vmul.f32 %v490, %v647
      %v664 = vmul.f32 %v492, %v648
      %v665 = vmul.f32 %v494, %v649
      %v666 = vmul.f32 %v496, %v650
      %v667 = vmul.f32 %v498, %v651
      %v668 = vmul.f32 %v500, %v652
      %v669 = vmul.f32 %v502, %v653
      %v670 = vmul.f32 %v504, %v654
      %v671 = vmul.f32 %v506, %v655
      %v672 = vmul.f32 %v508, %v656
      %v673 = vmul.f32 %v510, %v657
      %v674 = vmul.f32 %v512, %v658
      %v675 = vmul.f32 %v514, %v659
      %v676 = vmul.f32 %v516, %v660
      %677 = vadd.xlane.f32.xlu0 %v614
      %v678 = vpop.xlane.xlu0 %677
      %679 = vadd.xlane.f32.xlu0 %v616
      %v680 = vpop.xlane.xlu0 %679
      %681 = vadd.xlane.f32.xlu0 %v618
      %v682 = vpop.xlane.xlu0 %681
      %683 = vadd.xlane.f32.xlu0 %v620
      %v684 = vpop.xlane.xlu0 %683
      %685 = vadd.xlane.f32.xlu0 %v622
      %v686 = vpop.xlane.xlu0 %685
      %687 = vadd.xlane.f32.xlu0 %v624
      %v688 = vpop.xlane.xlu0 %687
      %689 = vadd.xlane.f32.xlu0 %v626
      %v690 = vpop.xlane.xlu0 %689
      %691 = vadd.xlane.f32.xlu0 %v628
      %v692 = vpop.xlane.xlu0 %691
      %693 = vadd.xlane.f32.xlu0 %v630
      %v694 = vpop.xlane.xlu0 %693
      %695 = vadd.xlane.f32.xlu0 %v632
      %v696 = vpop.xlane.xlu0 %695
      %697 = vadd.xlane.f32.xlu0 %v634
      %v698 = vpop.xlane.xlu0 %697
      %699 = vadd.xlane.f32.xlu0 %v636
      %v700 = vpop.xlane.xlu0 %699
      %701 = vadd.xlane.f32.xlu0 %v638
      %v702 = vpop.xlane.xlu0 %701
      %703 = vadd.xlane.f32.xlu0 %v640
      %v704 = vpop.xlane.xlu0 %703
      %705 = vadd.xlane.f32.xlu0 %v642
      %v706 = vpop.xlane.xlu0 %705
      %707 = vadd.xlane.f32.xlu0 %v644
      %v708 = vpop.xlane.xlu0 %707
      %v709 = vadd.f32 %v661, %v678
      %v710 = vadd.f32 %v662, %v680
      %v711 = vadd.f32 %v663, %v682
      %v712 = vadd.f32 %v664, %v684
      %v713 = vadd.f32 %v665, %v686
      %v714 = vadd.f32 %v666, %v688
      %v715 = vadd.f32 %v667, %v690
      %v716 = vadd.f32 %v668, %v692
      %v717 = vadd.f32 %v669, %v694
      %v718 = vadd.f32 %v670, %v696
      %v719 = vadd.f32 %v671, %v698
      %v720 = vadd.f32 %v672, %v700
      %v721 = vadd.f32 %v673, %v702
      %v722 = vadd.f32 %v674, %v704
      %v723 = vadd.f32 %v675, %v706
      %v724 = vadd.f32 %v676, %v708
      %vm725 = vcmask 7168
      %726 = vst.msk [vmem:[#allocation3] sm:$0xff] %vm725, %v709
      %727 = vst.msk [vmem:[#allocation3 + $0x8] sm:$0xff] %vm725, %v710
      %728 = vst.msk [vmem:[#allocation3 + $0x10] sm:$0xff] %vm725, %v711
      %729 = vst.msk [vmem:[#allocation3 + $0x18] sm:$0xff] %vm725, %v712
      %730 = vst.msk [vmem:[#allocation3 + $0x20] sm:$0xff] %vm725, %v713
      %731 = vst.msk [vmem:[#allocation3 + $0x28] sm:$0xff] %vm725, %v714
      %732 = vst.msk [vmem:[#allocation3 + $0x30] sm:$0xff] %vm725, %v715
      %733 = vst.msk [vmem:[#allocation3 + $0x38] sm:$0xff] %vm725, %v716
      %734 = vst.msk [vmem:[#allocation3 + $0x40] sm:$0xff] %vm725, %v717
      %735 = vst.msk [vmem:[#allocation3 + $0x48] sm:$0xff] %vm725, %v718
      %736 = vst.msk [vmem:[#allocation3 + $0x50] sm:$0xff] %vm725, %v719
      %737 = vst.msk [vmem:[#allocation3 + $0x58] sm:$0xff] %vm725, %v720
      %738 = vst.msk [vmem:[#allocation3 + $0x60] sm:$0xff] %vm725, %v721
      %739 = vst.msk [vmem:[#allocation3 + $0x68] sm:$0xff] %vm725, %v722
      %740 = vst.msk [vmem:[#allocation3 + $0x70] sm:$0xff] %vm725, %v723
      %741 = vst.msk [vmem:[#allocation3 + $0x78] sm:$0xff] %vm725, %v724
      %742 = vmatpush.msra.mxu0 %v310
      %743 = vmatpush.msra.mxu0 %v309
      %744 = vmatpush.msra.mxu0 %v308
      %745 = vmatpush.msra.mxu0 %v307
      %746 = vmatpush.msra.mxu0 %v306
      %747 = vmatpush.msra.mxu0 %v305
      %748 = vmatpush.msra.mxu0 %v304
      %749 = vmatpush.msra.mxu0 %v303
      %750 = vmatpush.msra.mxu0 %v302
      %751 = vmatpush.msra.mxu0 %v301
      %752 = vmatpush.msra.mxu0 %v300
      %753 = vmatpush.msra.mxu0 %v299
      %754 = vmatpush.msra.mxu0 %v298
      %755 = vmatpush.msra.mxu0 %v297
      %756 = vmatpush.msra.mxu0 %v296
      %757 = vmatpush.msra.mxu0 %v295
      %758 = vmatmul.f32.gmra.mxu0 %v614
      %v759 = vpop.f32.mrf.mxu0
      %v760 = vadd.f32 0.0, %v759
      %761 = vmatmul.f32.gmra.mxu0 %v616
      %v762 = vpop.f32.mrf.mxu0
      %v763 = vadd.f32 0.0, %v762
      %764 = vmatmul.f32.gmra.mxu0 %v618
      %v765 = vpop.f32.mrf.mxu0
      %v766 = vadd.f32 0.0, %v765
      %767 = vmatmul.f32.gmra.mxu0 %v620
      %v768 = vpop.f32.mrf.mxu0
      %v769 = vadd.f32 0.0, %v768
      %770 = vmatmul.f32.gmra.mxu0 %v622
      %v771 = vpop.f32.mrf.mxu0
      %v772 = vadd.f32 0.0, %v771
      %773 = vmatmul.f32.gmra.mxu0 %v624
      %v774 = vpop.f32.mrf.mxu0
      %v775 = vadd.f32 0.0, %v774
      %776 = vmatmul.f32.gmra.mxu0 %v626
      %v777 = vpop.f32.mrf.mxu0
      %v778 = vadd.f32 0.0, %v777
      %779 = vmatmul.f32.gmra.mxu0 %v628
      %v780 = vpop.f32.mrf.mxu0
      %v781 = vadd.f32 0.0, %v780
      %782 = vmatmul.f32.gmra.mxu0 %v630
      %v783 = vpop.f32.mrf.mxu0
      %v784 = vadd.f32 0.0, %v783
      %785 = vmatmul.f32.gmra.mxu0 %v632
      %v786 = vpop.f32.mrf.mxu0
      %v787 = vadd.f32 0.0, %v786
      %788 = vmatmul.f32.gmra.mxu0 %v634
      %v789 = vpop.f32.mrf.mxu0
      %v790 = vadd.f32 0.0, %v789
      %791 = vmatmul.f32.gmra.mxu0 %v636
      %v792 = vpop.f32.mrf.mxu0
      %v793 = vadd.f32 0.0, %v792
      %794 = vmatmul.f32.gmra.mxu0 %v638
      %v795 = vpop.f32.mrf.mxu0
      %v796 = vadd.f32 0.0, %v795
      %797 = vmatmul.f32.gmra.mxu0 %v640
      %v798 = vpop.f32.mrf.mxu0
      %v799 = vadd.f32 0.0, %v798
      %800 = vmatmul.f32.gmra.mxu0 %v642
      %v801 = vpop.f32.mrf.mxu0
      %v802 = vadd.f32 0.0, %v801
      %803 = vmatmul.f32.gmra.mxu0 %v644
      %v804 = vpop.f32.mrf.mxu0
      %v805 = vadd.f32 0.0, %v804
      %806 = vdwg.mxu0
      %v807 = vld [vmem:[#allocation4] sm:$0xff]
      %v808 = vld [vmem:[#allocation4 + $0x8] sm:$0xff]
      %v809 = vld [vmem:[#allocation4 + $0x10] sm:$0xff]
      %v810 = vld [vmem:[#allocation4 + $0x18] sm:$0xff]
      %v811 = vld [vmem:[#allocation4 + $0x20] sm:$0xff]
      %v812 = vld [vmem:[#allocation4 + $0x28] sm:$0xff]
      %v813 = vld [vmem:[#allocation4 + $0x30] sm:$0xff]
      %v814 = vld [vmem:[#allocation4 + $0x38] sm:$0xff]
      %v815 = vld [vmem:[#allocation4 + $0x40] sm:$0xff]
      %v816 = vld [vmem:[#allocation4 + $0x48] sm:$0xff]
      %v817 = vld [vmem:[#allocation4 + $0x50] sm:$0xff]
      %v818 = vld [vmem:[#allocation4 + $0x58] sm:$0xff]
      %v819 = vld [vmem:[#allocation4 + $0x60] sm:$0xff]
      %v820 = vld [vmem:[#allocation4 + $0x68] sm:$0xff]
      %v821 = vld [vmem:[#allocation4 + $0x70] sm:$0xff]
      %v822 = vld [vmem:[#allocation4 + $0x78] sm:$0xff]
      %824 = vset.pattern.permute.xlu0 0
      %825 = vperm.xlu0 %824, %v486
      %v826 = vpop.permute.xlu0 %825
      %829 = vset.pattern.permute.xlu0 0
      %830 = vperm.xlu0 %829, %v488
      %v831 = vpop.permute.xlu0 %830
      %834 = vset.pattern.permute.xlu0 0
      %835 = vperm.xlu0 %834, %v490
      %v836 = vpop.permute.xlu0 %835
      %839 = vset.pattern.permute.xlu0 0
      %840 = vperm.xlu0 %839, %v492
      %v841 = vpop.permute.xlu0 %840
      %844 = vset.pattern.permute.xlu0 0
      %845 = vperm.xlu0 %844, %v494
      %v846 = vpop.permute.xlu0 %845
      %849 = vset.pattern.permute.xlu0 0
      %850 = vperm.xlu0 %849, %v496
      %v851 = vpop.permute.xlu0 %850
      %854 = vset.pattern.permute.xlu0 0
      %855 = vperm.xlu0 %854, %v498
      %v856 = vpop.permute.xlu0 %855
      %859 = vset.pattern.permute.xlu0 0
      %860 = vperm.xlu0 %859, %v500
      %v861 = vpop.permute.xlu0 %860
      %864 = vset.pattern.permute.xlu0 0
      %865 = vperm.xlu0 %864, %v502
      %v866 = vpop.permute.xlu0 %865
      %869 = vset.pattern.permute.xlu0 0
      %870 = vperm.xlu0 %869, %v504
      %v871 = vpop.permute.xlu0 %870
      %874 = vset.pattern.permute.xlu0 0
      %875 = vperm.xlu0 %874, %v506
      %v876 = vpop.permute.xlu0 %875
      %879 = vset.pattern.permute.xlu0 0
      %880 = vperm.xlu0 %879, %v508
      %v881 = vpop.permute.xlu0 %880
      %884 = vset.pattern.permute.xlu0 0
      %885 = vperm.xlu0 %884, %v510
      %v886 = vpop.permute.xlu0 %885
      %889 = vset.pattern.permute.xlu0 0
      %890 = vperm.xlu0 %889, %v512
      %v891 = vpop.permute.xlu0 %890
      %894 = vset.pattern.permute.xlu0 0
      %895 = vperm.xlu0 %894, %v514
      %v896 = vpop.permute.xlu0 %895
      %899 = vset.pattern.permute.xlu0 0
      %900 = vperm.xlu0 %899, %v516
      %v901 = vpop.permute.xlu0 %900
      %v903 = vmul.f32 %v826, %v807
      %v904 = vmul.f32 %v831, %v808
      %v905 = vmul.f32 %v836, %v809
      %v906 = vmul.f32 %v841, %v810
      %v907 = vmul.f32 %v846, %v811
      %v908 = vmul.f32 %v851, %v812
      %v909 = vmul.f32 %v856, %v813
      %v910 = vmul.f32 %v861, %v814
      %v911 = vmul.f32 %v866, %v815
      %v912 = vmul.f32 %v871, %v816
      %v913 = vmul.f32 %v876, %v817
      %v914 = vmul.f32 %v881, %v818
      %v915 = vmul.f32 %v886, %v819
      %v916 = vmul.f32 %v891, %v820
      %v917 = vmul.f32 %v896, %v821
      %v918 = vmul.f32 %v901, %v822
      %v919 = vadd.f32 %v903, %v760
      %v920 = vadd.f32 %v904, %v763
      %v921 = vadd.f32 %v905, %v766
      %v922 = vadd.f32 %v906, %v769
      %v923 = vadd.f32 %v907, %v772
      %v924 = vadd.f32 %v908, %v775
      %v925 = vadd.f32 %v909, %v778
      %v926 = vadd.f32 %v910, %v781
      %v927 = vadd.f32 %v911, %v784
      %v928 = vadd.f32 %v912, %v787
      %v929 = vadd.f32 %v913, %v790
      %v930 = vadd.f32 %v914, %v793
      %v931 = vadd.f32 %v915, %v796
      %v932 = vadd.f32 %v916, %v799
      %v933 = vadd.f32 %v917, %v802
      %v934 = vadd.f32 %v918, %v805
      %935 = vst [vmem:[#allocation4] sm:$0xff] %v919
      %936 = vst [vmem:[#allocation4 + $0x8] sm:$0xff] %v920
      %937 = vst [vmem:[#allocation4 + $0x10] sm:$0xff] %v921
      %938 = vst [vmem:[#allocation4 + $0x18] sm:$0xff] %v922
      %939 = vst [vmem:[#allocation4 + $0x20] sm:$0xff] %v923
      %940 = vst [vmem:[#allocation4 + $0x28] sm:$0xff] %v924
      %941 = vst [vmem:[#allocation4 + $0x30] sm:$0xff] %v925
      %942 = vst [vmem:[#allocation4 + $0x38] sm:$0xff] %v926
      %943 = vst [vmem:[#allocation4 + $0x40] sm:$0xff] %v927
      %944 = vst [vmem:[#allocation4 + $0x48] sm:$0xff] %v928
      %945 = vst [vmem:[#allocation4 + $0x50] sm:$0xff] %v929
      %946 = vst [vmem:[#allocation4 + $0x58] sm:$0xff] %v930
      %947 = vst [vmem:[#allocation4 + $0x60] sm:$0xff] %v931
      %948 = vst [vmem:[#allocation4 + $0x68] sm:$0xff] %v932
      %949 = vst [vmem:[#allocation4 + $0x70] sm:$0xff] %v933
      %950 = vst [vmem:[#allocation4 + $0x78] sm:$0xff] %v934
      %951 = vst.msk [vmem:[#allocation2] sm:$0xff] %vm725, %v453
      %952 = vst.msk [vmem:[#allocation2 + $0x8] sm:$0xff] %vm725, %v454
      %953 = vst.msk [vmem:[#allocation2 + $0x10] sm:$0xff] %vm725, %v455
      %954 = vst.msk [vmem:[#allocation2 + $0x18] sm:$0xff] %vm725, %v456
      %955 = vst.msk [vmem:[#allocation2 + $0x20] sm:$0xff] %vm725, %v457
      %956 = vst.msk [vmem:[#allocation2 + $0x28] sm:$0xff] %vm725, %v458
      %957 = vst.msk [vmem:[#allocation2 + $0x30] sm:$0xff] %vm725, %v459
      %958 = vst.msk [vmem:[#allocation2 + $0x38] sm:$0xff] %vm725, %v460
      %959 = vst.msk [vmem:[#allocation2 + $0x40] sm:$0xff] %vm725, %v461
      %960 = vst.msk [vmem:[#allocation2 + $0x48] sm:$0xff] %vm725, %v462
      %961 = vst.msk [vmem:[#allocation2 + $0x50] sm:$0xff] %vm725, %v463
      %962 = vst.msk [vmem:[#allocation2 + $0x58] sm:$0xff] %vm725, %v464
      %963 = vst.msk [vmem:[#allocation2 + $0x60] sm:$0xff] %vm725, %v465
      %964 = vst.msk [vmem:[#allocation2 + $0x68] sm:$0xff] %vm725, %v466
      %965 = vst.msk [vmem:[#allocation2 + $0x70] sm:$0xff] %vm725, %v467
      %966 = vst.msk [vmem:[#allocation2 + $0x78] sm:$0xff] %vm725, %v468
      // Predicated region
      $region33: #{dot_product_attention.1} parent=27 // pred_check
        %p967 = pneg %p226
      $region34: #{dot_product_attention.1} parent=27 // pred_check_branch
        %969 = sbr.rel (%p967) target = $region36
      $region35: #{dot_product_attention.1} parent=27 // pred_region
        %v970 = vld [vmem:[#allocation3] sm:$0xff]
        %v971 = vld [vmem:[#allocation3 + $0x8] sm:$0xff]
        %v972 = vld [vmem:[#allocation3 + $0x10] sm:$0xff]
        %v973 = vld [vmem:[#allocation3 + $0x18] sm:$0xff]
        %v974 = vld [vmem:[#allocation3 + $0x20] sm:$0xff]
        %v975 = vld [vmem:[#allocation3 + $0x28] sm:$0xff]
        %v976 = vld [vmem:[#allocation3 + $0x30] sm:$0xff]
        %v977 = vld [vmem:[#allocation3 + $0x38] sm:$0xff]
        %v978 = vld [vmem:[#allocation3 + $0x40] sm:$0xff]
        %v979 = vld [vmem:[#allocation3 + $0x48] sm:$0xff]
        %v980 = vld [vmem:[#allocation3 + $0x50] sm:$0xff]
        %v981 = vld [vmem:[#allocation3 + $0x58] sm:$0xff]
        %v982 = vld [vmem:[#allocation3 + $0x60] sm:$0xff]
        %v983 = vld [vmem:[#allocation3 + $0x68] sm:$0xff]
        %v984 = vld [vmem:[#allocation3 + $0x70] sm:$0xff]
        %v985 = vld [vmem:[#allocation3 + $0x78] sm:$0xff]
        %v986 = vrcp.pop %v970
        %v987 = vmul.f32 %v970, %v986
        %v988 = vsub.f32 1.0, %v987
        %v989 = vmul.f32 %v986, %v988
        %v990 = vadd.f32 %v986, %v989
        %vm991 = vweird.f32 %v970
        %vm992 = vweird.f32 %v986
        %vm993 = vmor %vm991, %vm992
        %v994 = vsel %vm993, %v986, %v990
        %v995 = vand.u32 2147483647, %v970
        %vm996 = vcmp.eq.f32.partialorder %v995, 8.507059e+37
        %v997 = vand.u32 %v970, 2147483648
        %v998 = vor.u32 1.1754944e-38, %v997
        %v999 = vsel %vm996, %v998, %v994
        %v1000 = vrcp.pop %v971
        %v1001 = vmul.f32 %v971, %v1000
        %v1002 = vsub.f32 1.0, %v1001
        %v1003 = vmul.f32 %v1000, %v1002
        %v1004 = vadd.f32 %v1000, %v1003
        %vm1005 = vweird.f32 %v971
        %vm1006 = vweird.f32 %v1000
        %vm1007 = vmor %vm1005, %vm1006
        %v1008 = vsel %vm1007, %v1000, %v1004
        %v1009 = vand.u32 2147483647, %v971
        %vm1010 = vcmp.eq.f32.partialorder %v1009, 8.507059e+37
        %v1011 = vand.u32 %v971, 2147483648
        %v1012 = vor.u32 1.1754944e-38, %v1011
        %v1013 = vsel %vm1010, %v1012, %v1008
        %v1014 = vrcp.pop %v972
        %v1015 = vmul.f32 %v972, %v1014
        %v1016 = vsub.f32 1.0, %v1015
        %v1017 = vmul.f32 %v1014, %v1016
        %v1018 = vadd.f32 %v1014, %v1017
        %vm1019 = vweird.f32 %v972
        %vm1020 = vweird.f32 %v1014
        %vm1021 = vmor %vm1019, %vm1020
        %v1022 = vsel %vm1021, %v1014, %v1018
        %v1023 = vand.u32 2147483647, %v972
        %vm1024 = vcmp.eq.f32.partialorder %v1023, 8.507059e+37
        %v1025 = vand.u32 %v972, 2147483648
        %v1026 = vor.u32 1.1754944e-38, %v1025
        %v1027 = vsel %vm1024, %v1026, %v1022
        %v1028 = vrcp.pop %v973
        %v1029 = vmul.f32 %v973, %v1028
        %v1030 = vsub.f32 1.0, %v1029
        %v1031 = vmul.f32 %v1028, %v1030
        %v1032 = vadd.f32 %v1028, %v1031
        %vm1033 = vweird.f32 %v973
        %vm1034 = vweird.f32 %v1028
        %vm1035 = vmor %vm1033, %vm1034
        %v1036 = vsel %vm1035, %v1028, %v1032
        %v1037 = vand.u32 2147483647, %v973
        %vm1038 = vcmp.eq.f32.partialorder %v1037, 8.507059e+37
        %v1039 = vand.u32 %v973, 2147483648
        %v1040 = vor.u32 1.1754944e-38, %v1039
        %v1041 = vsel %vm1038, %v1040, %v1036
        %v1042 = vrcp.pop %v974
        %v1043 = vmul.f32 %v974, %v1042
        %v1044 = vsub.f32 1.0, %v1043
        %v1045 = vmul.f32 %v1042, %v1044
        %v1046 = vadd.f32 %v1042, %v1045
        %vm1047 = vweird.f32 %v974
        %vm1048 = vweird.f32 %v1042
        %vm1049 = vmor %vm1047, %vm1048
        %v1050 = vsel %vm1049, %v1042, %v1046
        %v1051 = vand.u32 2147483647, %v974
        %vm1052 = vcmp.eq.f32.partialorder %v1051, 8.507059e+37
        %v1053 = vand.u32 %v974, 2147483648
        %v1054 = vor.u32 1.1754944e-38, %v1053
        %v1055 = vsel %vm1052, %v1054, %v1050
        %v1056 = vrcp.pop %v975
        %v1057 = vmul.f32 %v975, %v1056
        %v1058 = vsub.f32 1.0, %v1057
        %v1059 = vmul.f32 %v1056, %v1058
        %v1060 = vadd.f32 %v1056, %v1059
        %vm1061 = vweird.f32 %v975
        %vm1062 = vweird.f32 %v1056
        %vm1063 = vmor %vm1061, %vm1062
        %v1064 = vsel %vm1063, %v1056, %v1060
        %v1065 = vand.u32 2147483647, %v975
        %vm1066 = vcmp.eq.f32.partialorder %v1065, 8.507059e+37
        %v1067 = vand.u32 %v975, 2147483648
        %v1068 = vor.u32 1.1754944e-38, %v1067
        %v1069 = vsel %vm1066, %v1068, %v1064
        %v1070 = vrcp.pop %v976
        %v1071 = vmul.f32 %v976, %v1070
        %v1072 = vsub.f32 1.0, %v1071
        %v1073 = vmul.f32 %v1070, %v1072
        %v1074 = vadd.f32 %v1070, %v1073
        %vm1075 = vweird.f32 %v976
        %vm1076 = vweird.f32 %v1070
        %vm1077 = vmor %vm1075, %vm1076
        %v1078 = vsel %vm1077, %v1070, %v1074
        %v1079 = vand.u32 2147483647, %v976
        %vm1080 = vcmp.eq.f32.partialorder %v1079, 8.507059e+37
        %v1081 = vand.u32 %v976, 2147483648
        %v1082 = vor.u32 1.1754944e-38, %v1081
        %v1083 = vsel %vm1080, %v1082, %v1078
        %v1084 = vrcp.pop %v977
        %v1085 = vmul.f32 %v977, %v1084
        %v1086 = vsub.f32 1.0, %v1085
        %v1087 = vmul.f32 %v1084, %v1086
        %v1088 = vadd.f32 %v1084, %v1087
        %vm1089 = vweird.f32 %v977
        %vm1090 = vweird.f32 %v1084
        %vm1091 = vmor %vm1089, %vm1090
        %v1092 = vsel %vm1091, %v1084, %v1088
        %v1093 = vand.u32 2147483647, %v977
        %vm1094 = vcmp.eq.f32.partialorder %v1093, 8.507059e+37
        %v1095 = vand.u32 %v977, 2147483648
        %v1096 = vor.u32 1.1754944e-38, %v1095
        %v1097 = vsel %vm1094, %v1096, %v1092
        %v1098 = vrcp.pop %v978
        %v1099 = vmul.f32 %v978, %v1098
        %v1100 = vsub.f32 1.0, %v1099
        %v1101 = vmul.f32 %v1098, %v1100
        %v1102 = vadd.f32 %v1098, %v1101
        %vm1103 = vweird.f32 %v978
        %vm1104 = vweird.f32 %v1098
        %vm1105 = vmor %vm1103, %vm1104
        %v1106 = vsel %vm1105, %v1098, %v1102
        %v1107 = vand.u32 2147483647, %v978
        %vm1108 = vcmp.eq.f32.partialorder %v1107, 8.507059e+37
        %v1109 = vand.u32 %v978, 2147483648
        %v1110 = vor.u32 1.1754944e-38, %v1109
        %v1111 = vsel %vm1108, %v1110, %v1106
        %v1112 = vrcp.pop %v979
        %v1113 = vmul.f32 %v979, %v1112
        %v1114 = vsub.f32 1.0, %v1113
        %v1115 = vmul.f32 %v1112, %v1114
        %v1116 = vadd.f32 %v1112, %v1115
        %vm1117 = vweird.f32 %v979
        %vm1118 = vweird.f32 %v1112
        %vm1119 = vmor %vm1117, %vm1118
        %v1120 = vsel %vm1119, %v1112, %v1116
        %v1121 = vand.u32 2147483647, %v979
        %vm1122 = vcmp.eq.f32.partialorder %v1121, 8.507059e+37
        %v1123 = vand.u32 %v979, 2147483648
        %v1124 = vor.u32 1.1754944e-38, %v1123
        %v1125 = vsel %vm1122, %v1124, %v1120
        %v1126 = vrcp.pop %v980
        %v1127 = vmul.f32 %v980, %v1126
        %v1128 = vsub.f32 1.0, %v1127
        %v1129 = vmul.f32 %v1126, %v1128
        %v1130 = vadd.f32 %v1126, %v1129
        %vm1131 = vweird.f32 %v980
        %vm1132 = vweird.f32 %v1126
        %vm1133 = vmor %vm1131, %vm1132
        %v1134 = vsel %vm1133, %v1126, %v1130
        %v1135 = vand.u32 2147483647, %v980
        %vm1136 = vcmp.eq.f32.partialorder %v1135, 8.507059e+37
        %v1137 = vand.u32 %v980, 2147483648
        %v1138 = vor.u32 1.1754944e-38, %v1137
        %v1139 = vsel %vm1136, %v1138, %v1134
        %v1140 = vrcp.pop %v981
        %v1141 = vmul.f32 %v981, %v1140
        %v1142 = vsub.f32 1.0, %v1141
        %v1143 = vmul.f32 %v1140, %v1142
        %v1144 = vadd.f32 %v1140, %v1143
        %vm1145 = vweird.f32 %v981
        %vm1146 = vweird.f32 %v1140
        %vm1147 = vmor %vm1145, %vm1146
        %v1148 = vsel %vm1147, %v1140, %v1144
        %v1149 = vand.u32 2147483647, %v981
        %vm1150 = vcmp.eq.f32.partialorder %v1149, 8.507059e+37
        %v1151 = vand.u32 %v981, 2147483648
        %v1152 = vor.u32 1.1754944e-38, %v1151
        %v1153 = vsel %vm1150, %v1152, %v1148
        %v1154 = vrcp.pop %v982
        %v1155 = vmul.f32 %v982, %v1154
        %v1156 = vsub.f32 1.0, %v1155
        %v1157 = vmul.f32 %v1154, %v1156
        %v1158 = vadd.f32 %v1154, %v1157
        %vm1159 = vweird.f32 %v982
        %vm1160 = vweird.f32 %v1154
        %vm1161 = vmor %vm1159, %vm1160
        %v1162 = vsel %vm1161, %v1154, %v1158
        %v1163 = vand.u32 2147483647, %v982
        %vm1164 = vcmp.eq.f32.partialorder %v1163, 8.507059e+37
        %v1165 = vand.u32 %v982, 2147483648
        %v1166 = vor.u32 1.1754944e-38, %v1165
        %v1167 = vsel %vm1164, %v1166, %v1162
        %v1168 = vrcp.pop %v983
        %v1169 = vmul.f32 %v983, %v1168
        %v1170 = vsub.f32 1.0, %v1169
        %v1171 = vmul.f32 %v1168, %v1170
        %v1172 = vadd.f32 %v1168, %v1171
        %vm1173 = vweird.f32 %v983
        %vm1174 = vweird.f32 %v1168
        %vm1175 = vmor %vm1173, %vm1174
        %v1176 = vsel %vm1175, %v1168, %v1172
        %v1177 = vand.u32 2147483647, %v983
        %vm1178 = vcmp.eq.f32.partialorder %v1177, 8.507059e+37
        %v1179 = vand.u32 %v983, 2147483648
        %v1180 = vor.u32 1.1754944e-38, %v1179
        %v1181 = vsel %vm1178, %v1180, %v1176
        %v1182 = vrcp.pop %v984
        %v1183 = vmul.f32 %v984, %v1182
        %v1184 = vsub.f32 1.0, %v1183
        %v1185 = vmul.f32 %v1182, %v1184
        %v1186 = vadd.f32 %v1182, %v1185
        %vm1187 = vweird.f32 %v984
        %vm1188 = vweird.f32 %v1182
        %vm1189 = vmor %vm1187, %vm1188
        %v1190 = vsel %vm1189, %v1182, %v1186
        %v1191 = vand.u32 2147483647, %v984
        %vm1192 = vcmp.eq.f32.partialorder %v1191, 8.507059e+37
        %v1193 = vand.u32 %v984, 2147483648
        %v1194 = vor.u32 1.1754944e-38, %v1193
        %v1195 = vsel %vm1192, %v1194, %v1190
        %v1196 = vrcp.pop %v985
        %v1197 = vmul.f32 %v985, %v1196
        %v1198 = vsub.f32 1.0, %v1197
        %v1199 = vmul.f32 %v1196, %v1198
        %v1200 = vadd.f32 %v1196, %v1199
        %vm1201 = vweird.f32 %v985
        %vm1202 = vweird.f32 %v1196
        %vm1203 = vmor %vm1201, %vm1202
        %v1204 = vsel %vm1203, %v1196, %v1200
        %v1205 = vand.u32 2147483647, %v985
        %vm1206 = vcmp.eq.f32.partialorder %v1205, 8.507059e+37
        %v1207 = vand.u32 %v985, 2147483648
        %v1208 = vor.u32 1.1754944e-38, %v1207
        %v1209 = vsel %vm1206, %v1208, %v1204
        %v1210 = vld [vmem:[#allocation4] sm:$0xff]
        %v1211 = vld [vmem:[#allocation4 + $0x8] sm:$0xff]
        %v1212 = vld [vmem:[#allocation4 + $0x10] sm:$0xff]
        %v1213 = vld [vmem:[#allocation4 + $0x18] sm:$0xff]
        %v1214 = vld [vmem:[#allocation4 + $0x20] sm:$0xff]
        %v1215 = vld [vmem:[#allocation4 + $0x28] sm:$0xff]
        %v1216 = vld [vmem:[#allocation4 + $0x30] sm:$0xff]
        %v1217 = vld [vmem:[#allocation4 + $0x38] sm:$0xff]
        %v1218 = vld [vmem:[#allocation4 + $0x40] sm:$0xff]
        %v1219 = vld [vmem:[#allocation4 + $0x48] sm:$0xff]
        %v1220 = vld [vmem:[#allocation4 + $0x50] sm:$0xff]
        %v1221 = vld [vmem:[#allocation4 + $0x58] sm:$0xff]
        %v1222 = vld [vmem:[#allocation4 + $0x60] sm:$0xff]
        %v1223 = vld [vmem:[#allocation4 + $0x68] sm:$0xff]
        %v1224 = vld [vmem:[#allocation4 + $0x70] sm:$0xff]
        %v1225 = vld [vmem:[#allocation4 + $0x78] sm:$0xff]
        %1227 = vset.pattern.permute.xlu0 0
        %1228 = vperm.xlu0 %1227, %v999
        %v1229 = vpop.permute.xlu0 %1228
        %1232 = vset.pattern.permute.xlu0 0
        %1233 = vperm.xlu0 %1232, %v1013
        %v1234 = vpop.permute.xlu0 %1233
        %1237 = vset.pattern.permute.xlu0 0
        %1238 = vperm.xlu0 %1237, %v1027
        %v1239 = vpop.permute.xlu0 %1238
        %1242 = vset.pattern.permute.xlu0 0
        %1243 = vperm.xlu0 %1242, %v1041
        %v1244 = vpop.permute.xlu0 %1243
        %1247 = vset.pattern.permute.xlu0 0
        %1248 = vperm.xlu0 %1247, %v1055
        %v1249 = vpop.permute.xlu0 %1248
        %1252 = vset.pattern.permute.xlu0 0
        %1253 = vperm.xlu0 %1252, %v1069
        %v1254 = vpop.permute.xlu0 %1253
        %1257 = vset.pattern.permute.xlu0 0
        %1258 = vperm.xlu0 %1257, %v1083
        %v1259 = vpop.permute.xlu0 %1258
        %1262 = vset.pattern.permute.xlu0 0
        %1263 = vperm.xlu0 %1262, %v1097
        %v1264 = vpop.permute.xlu0 %1263
        %1267 = vset.pattern.permute.xlu0 0
        %1268 = vperm.xlu0 %1267, %v1111
        %v1269 = vpop.permute.xlu0 %1268
        %1272 = vset.pattern.permute.xlu0 0
        %1273 = vperm.xlu0 %1272, %v1125
        %v1274 = vpop.permute.xlu0 %1273
        %1277 = vset.pattern.permute.xlu0 0
        %1278 = vperm.xlu0 %1277, %v1139
        %v1279 = vpop.permute.xlu0 %1278
        %1282 = vset.pattern.permute.xlu0 0
        %1283 = vperm.xlu0 %1282, %v1153
        %v1284 = vpop.permute.xlu0 %1283
        %1287 = vset.pattern.permute.xlu0 0
        %1288 = vperm.xlu0 %1287, %v1167
        %v1289 = vpop.permute.xlu0 %1288
        %1292 = vset.pattern.permute.xlu0 0
        %1293 = vperm.xlu0 %1292, %v1181
        %v1294 = vpop.permute.xlu0 %1293
        %1297 = vset.pattern.permute.xlu0 0
        %1298 = vperm.xlu0 %1297, %v1195
        %v1299 = vpop.permute.xlu0 %1298
        %1302 = vset.pattern.permute.xlu0 0
        %1303 = vperm.xlu0 %1302, %v1209
        %v1304 = vpop.permute.xlu0 %1303
        %v1306 = vmul.f32 %v1210, %v1229
        %v1307 = vmul.f32 %v1211, %v1234
        %v1308 = vmul.f32 %v1212, %v1239
        %v1309 = vmul.f32 %v1213, %v1244
        %v1310 = vmul.f32 %v1214, %v1249
        %v1311 = vmul.f32 %v1215, %v1254
        %v1312 = vmul.f32 %v1216, %v1259
        %v1313 = vmul.f32 %v1217, %v1264
        %v1314 = vmul.f32 %v1218, %v1269
        %v1315 = vmul.f32 %v1219, %v1274
        %v1316 = vmul.f32 %v1220, %v1279
        %v1317 = vmul.f32 %v1221, %v1284
        %v1318 = vmul.f32 %v1222, %v1289
        %v1319 = vmul.f32 %v1223, %v1294
        %v1320 = vmul.f32 %v1224, %v1299
        %v1321 = vmul.f32 %v1225, %v1304
        %1322 = vst [vmem:[%s224] sm:$0xff] %v1306
        %1323 = vst [vmem:[%s224 + $0x8] sm:$0xff] %v1307
        %1324 = vst [vmem:[%s224 + $0x10] sm:$0xff] %v1308
        %1325 = vst [vmem:[%s224 + $0x18] sm:$0xff] %v1309
        %1326 = vst [vmem:[%s224 + $0x20] sm:$0xff] %v1310
        %1327 = vst [vmem:[%s224 + $0x28] sm:$0xff] %v1311
        %1328 = vst [vmem:[%s224 + $0x30] sm:$0xff] %v1312
        %1329 = vst [vmem:[%s224 + $0x38] sm:$0xff] %v1313
        %1330 = vst [vmem:[%s224 + $0x40] sm:$0xff] %v1314
        %1331 = vst [vmem:[%s224 + $0x48] sm:$0xff] %v1315
        %1332 = vst [vmem:[%s224 + $0x50] sm:$0xff] %v1316
        %1333 = vst [vmem:[%s224 + $0x58] sm:$0xff] %v1317
        %1334 = vst [vmem:[%s224 + $0x60] sm:$0xff] %v1318
        %1335 = vst [vmem:[%s224 + $0x68] sm:$0xff] %v1319
        %1336 = vst [vmem:[%s224 + $0x70] sm:$0xff] %v1320
        %1337 = vst [vmem:[%s224 + $0x78] sm:$0xff] %v1321
      $region36: #{dot_product_attention.1} parent=27 // pred_fallthru
        _
      %s1338 = smul.u32 16, %s19
      %p1339 = scmp.lt.s32.totalorder %s18, 1
      %s1340 = scalar_select %p1339, %s18, 1
      %p1341 = scmp.lt.s32.totalorder %s1338, 15
      %s1342 = scalar_select %p1341, %s1338, 15
      %s1343 = smul.addr %s1340, 16
      %s1344 = sadd.s32 %s1342, %s1343
      %s1345 = smul.addr %s1344, 8
      %s1346 = scalar_lea.vmem %s2, %s1345
      // Predicated region
      $region37: #{dot_product_attention.1} parent=27 // pred_check
        %p1347 = pneg %p108
      $region38: #{dot_product_attention.1} parent=27 // pred_check_branch
        %1349 = sbr.rel (%p1347) target = $region40
      $region39: #{dot_product_attention.1} parent=27 // pred_region
        %s1350 = smul.u32 16, %s19
      $region40: #{dot_product_attention.1} parent=27 // pred_fallthru
        _
    $region28: #{dot_product_attention.1} parent=5 // pred_fallthru
      _
    %p1351 = scmp.le.s32.totalorder 2, %s8
    // Predicated region
    $region41: #{dot_product_attention.1} parent=5 // pred_check
      %p1352 = pneg %p1351
    $region42: #{dot_product_attention.1} parent=5 // pred_check_branch
      %1354 = sbr.rel (%p1352) target = $region44
    $region43: #{dot_product_attention.1} parent=5 // pred_region
      %s1355 = ssub.s32 %s8, 2
      // Predicated region
      $region45: #{dot_product_attention.1} parent=43 // pred_check
        %p1356 = pneg %p114
      $region46: #{dot_product_attention.1} parent=43 // pred_check_branch
        %1358 = sbr.rel (%p1356) target = $region48
      $region47: #{dot_product_attention.1} parent=43 // pred_region
        %s1359 = smul.u32 16, %s22
        %p1360 = scmp.lt.s32.totalorder %s21, 1
        %s1361 = scalar_select %p1360, %s21, 1
        %p1362 = scmp.lt.s32.totalorder %s1359, 15
        %s1363 = scalar_select %p1362, %s1359, 15
        %s1364 = smul.addr %s1361, 16
        %s1365 = sadd.s32 %s1363, %s1364
        %s1366 = smul.addr %s1365, 8
        %s1367 = scalar_lea.vmem %s2, %s1366
      $region48: #{dot_product_attention.1} parent=43 // pred_fallthru
        _
    $region44: #{dot_product_attention.1} parent=5 // pred_fallthru
      _
  $region6: #{dot_product_attention.1} parent=0 // loop_footer
    %s12 = sadd.s32 1, %s8
  $region7: #{dot_product_attention.1} parent=0 // loop_footer_branch
    %7 = sbr.rel target = $region3
  $region8: #{dot_product_attention.1} parent=0 // loop_exit
    _

</llo_original>
